<compile_context>
chip_gen: v7x
topology: tpu7x:2x2x1
jax: 0.10.0
libtpu: 0.0.40
codegen_flags: <defaults>
</compile_context>

<pallas_src>
import jax
import jax.numpy as jnp
from jax.experimental import pallas as pl
from jax.experimental.pallas import tpu as pltpu


NEG_SLOPE = 0.01      # nn.LeakyReLU default negative_slope
OUT_PAD = 128         # lane-dense padded output width
NEG_BIG = -1e30       # padded logit bias -> exp() underflows to exactly 0


def _leaky_relu(x):
    return jnp.where(x > 0, x, NEG_SLOPE * x)


def mlp_kernel(x_ref,
               w1_ref, b1_ref,
               w2_ref, b2_ref,
               w3_ref, b3_ref,
               w4_ref, b4_ref,
               wo_ref, bo_ref,
               o_ref):
    # Hidden layers: bf16 matmul inputs, f32 MXU accumulation; bias-add and
    # LeakyReLU in f32, then cast back to bf16 for the next MXU push.
    h = jnp.dot(x_ref[...], w1_ref[...], preferred_element_type=jnp.float32)
    h = _leaky_relu(h + b1_ref[...]).astype(jnp.bfloat16)

    h = jnp.dot(h, w2_ref[...], preferred_element_type=jnp.float32)
    h = _leaky_relu(h + b2_ref[...]).astype(jnp.bfloat16)

    h = jnp.dot(h, w3_ref[...], preferred_element_type=jnp.float32)
    h = _leaky_relu(h + b3_ref[...]).astype(jnp.bfloat16)

    h = jnp.dot(h, w4_ref[...], preferred_element_type=jnp.float32)
    h = _leaky_relu(h + b4_ref[...]).astype(jnp.bfloat16)

    # Output layer: lane-dense (OUT_PAD) logits.  Padded bias lanes are -1e30,
    # so exp(padded - max) == 0 and the padded columns drop out of the softmax.
    logits = jnp.dot(h, wo_ref[...], preferred_element_type=jnp.float32)
    logits = logits + bo_ref[...]
    m = jnp.max(logits, axis=-1, keepdims=True)
    e = jnp.exp(logits - m)
    denom = jnp.sum(e, axis=-1, keepdims=True)
    o_ref[...] = (e * pl.reciprocal(denom, approx=True)).astype(o_ref.dtype)


def neural_network_forward(x, params, *, block_b=128):
    """x: (B, ...) float32 (flattened to (B, input_size)).
    params: f32 dict w1..w4, b1..b4, wo, bo (weights stored as (fan_in, fan_out))."""
    # nn.Flatten equivalent
    x = x.reshape(x.shape[0], -1)
    B, in_size = x.shape
    layer_size, out_size = params["wo"].shape

    # ---- lane-dense padded output layer ----
    wo_pad = jnp.zeros((layer_size, OUT_PAD), jnp.float32)
    wo_pad = wo_pad.at[:, :out_size].set(params["wo"])
    bo_pad = jnp.full((1, OUT_PAD), NEG_BIG, jnp.float32)
    bo_pad = bo_pad.at[:, :out_size].set(params["bo"])

    # ---- bf16 matmul operands (accumulation stays f32 in-kernel) ----
    x_bf = x.astype(jnp.bfloat16)
    w1 = params["w1"].astype(jnp.bfloat16)
    w2 = params["w2"].astype(jnp.bfloat16)
    w3 = params["w3"].astype(jnp.bfloat16)
    w4 = params["w4"].astype(jnp.bfloat16)
    wo = wo_pad.astype(jnp.bfloat16)
    b1, b2, b3, b4 = params["b1"], params["b2"], params["b3"], params["b4"]

    # ---- batch tiling: pad B up to a multiple of the batch tile ----
    tb = min(block_b, max(8, B))          # don't tile bigger than the batch
    tb = ((tb + 7) // 8) * 8              # keep sublane-aligned
    grid_b = pl.cdiv(B, tb)
    b_pad = grid_b * tb
    if b_pad != B:
        x_bf = jnp.pad(x_bf, ((0, b_pad - B), (0, 0)))

    operands = (x_bf, w1, b1, w2, b2, w3, b3, w4, b4, wo, bo_pad)

    def resident_spec(a):
        # weights/biases: same block every grid step -> stay VMEM-resident
        return pl.BlockSpec(a.shape, lambda i, _nd=a.ndim: (0,) * _nd)

    in_specs = [pl.BlockSpec((tb, in_size), lambda i: (i, 0))]
    in_specs += [resident_spec(a) for a in operands[1:]]

    out_pad = pl.pallas_call(
        mlp_kernel,
        out_shape=jax.ShapeDtypeStruct((b_pad, OUT_PAD), jnp.float32),
        grid=(grid_b,),
        in_specs=in_specs,
        out_specs=pl.BlockSpec((tb, OUT_PAD), lambda i: (i, 0)),
        compiler_params=pltpu.CompilerParams(
            dimension_semantics=("parallel",)),
    )(*operands)

    return out_pad[:B, :out_size]


def init_params(key, input_size, layer_size, output_size):
    """Deterministic init mimicking torch.nn.Linear default (uniform +/- 1/sqrt(fan_in))."""
    dims = [(input_size, layer_size),
            (layer_size, layer_size),
            (layer_size, layer_size),
            (layer_size, layer_size),
            (layer_size, output_size)]
    names = ["1", "2", "3", "4", "o"]
    params = {}
    for (fan_in, fan_out), name in zip(dims, names):
        key, kw, kb = jax.random.split(key, 3)
        bound = 1.0 / (fan_in ** 0.5)
        params[f"w{name}"] = jax.random.uniform(
            kw, (fan_in, fan_out), jnp.float32, -bound, bound)
        params[f"b{name}"] = jax.random.uniform(
            kb, (1, fan_out), jnp.float32, -bound, bound)
    return params


def reference_forward(x, params):
    """Pure-JAX f32 reference of the PyTorch forward pass (output_size == 2 path)."""
    h = x.reshape(x.shape[0], -1)
    for name in ["1", "2", "3", "4"]:
        h = h @ params[f"w{name}"] + params[f"b{name}"]
        h = jnp.where(h > 0, h, NEG_SLOPE * h)
    logits = h @ params["wo"] + params["bo"]
    return jax.nn.softmax(logits, axis=-1)


# TODO(synk): output_size == 1 (Sigmoid head) branch of the PyTorch module is
# not wired into the kernel; only the output_size == 2 softmax path is fused.

if __name__ == "__main__":
    # NeuralNetwork(input_size=32, output_size=2, layer_size=128, layer_cnt=4)
    B, INPUT_SIZE, LAYER_SIZE, OUTPUT_SIZE = 256, 32, 128, 2

    key = jax.random.PRNGKey(0)
    key, kx = jax.random.split(key)
    x = jax.random.normal(kx, (B, INPUT_SIZE), jnp.float32)

    params = init_params(key, INPUT_SIZE, LAYER_SIZE, OUTPUT_SIZE)

    out = neural_network_forward(x, params, block_b=128)
    out = jax.block_until_ready(out)

    assert out.shape == (B, OUTPUT_SIZE)
    # softmax rows must sum to ~1 (approx reciprocal -> loose tol)
    assert bool(jnp.allclose(jnp.sum(out, axis=-1), 1.0, atol=1e-2))
    # match the f32 reference (bf16 matmuls -> loose tol)
    ref = reference_forward(x, params)
    assert bool(jnp.max(jnp.abs(out - ref)) < 0.1)
    print("KERNEL_OK")
</pallas_src>

<mosaic_0001>
module attributes {stable_mosaic.version = 11 : i64} {
  func.func @mlp_kernel(%arg0: i32, %arg1: memref<128x32xbf16, #tpu.memory_space<vmem>>, %arg2: memref<32x128xbf16, #tpu.memory_space<vmem>>, %arg3: memref<1x128xf32, #tpu.memory_space<vmem>>, %arg4: memref<128x128xbf16, #tpu.memory_space<vmem>>, %arg5: memref<1x128xf32, #tpu.memory_space<vmem>>, %arg6: memref<128x128xbf16, #tpu.memory_space<vmem>>, %arg7: memref<1x128xf32, #tpu.memory_space<vmem>>, %arg8: memref<128x128xbf16, #tpu.memory_space<vmem>>, %arg9: memref<1x128xf32, #tpu.memory_space<vmem>>, %arg10: memref<128x128xbf16, #tpu.memory_space<vmem>>, %arg11: memref<1x128xf32, #tpu.memory_space<vmem>>, %arg12: memref<128x128xf32, #tpu.memory_space<vmem>>) attributes {dimension_semantics = [#tpu.dimension_semantics<parallel>], iteration_bounds = array<i64: 2>, scalar_prefetch = 0 : i64, scratch_operands = 0 : i64, tpu.core_type = #tpu.core_type<tc>, window_params = [{transform_indices = @transform_0, window_bounds = array<i64: 128, 32>}, {pipeline_mode = #tpu.pipeline_mode<synchronous>, transform_indices = @transform_1, window_bounds = array<i64: 32, 128>}, {pipeline_mode = #tpu.pipeline_mode<synchronous>, transform_indices = @transform_2, window_bounds = array<i64: 1, 128>}, {pipeline_mode = #tpu.pipeline_mode<synchronous>, transform_indices = @transform_3, window_bounds = array<i64: 128, 128>}, {pipeline_mode = #tpu.pipeline_mode<synchronous>, transform_indices = @transform_4, window_bounds = array<i64: 1, 128>}, {pipeline_mode = #tpu.pipeline_mode<synchronous>, transform_indices = @transform_5, window_bounds = array<i64: 128, 128>}, {pipeline_mode = #tpu.pipeline_mode<synchronous>, transform_indices = @transform_6, window_bounds = array<i64: 1, 128>}, {pipeline_mode = #tpu.pipeline_mode<synchronous>, transform_indices = @transform_7, window_bounds = array<i64: 128, 128>}, {pipeline_mode = #tpu.pipeline_mode<synchronous>, transform_indices = @transform_8, window_bounds = array<i64: 1, 128>}, {pipeline_mode = #tpu.pipeline_mode<synchronous>, transform_indices = @transform_9, window_bounds = array<i64: 128, 128>}, {pipeline_mode = #tpu.pipeline_mode<synchronous>, transform_indices = @transform_10, window_bounds = array<i64: 1, 128>}, {transform_indices = @transform_11, window_bounds = array<i64: 128, 128>}]} {
    %c0 = arith.constant 0 : index
    %c0_0 = arith.constant 0 : index
    %0 = vector.load %arg1[%c0, %c0_0] : memref<128x32xbf16, #tpu.memory_space<vmem>>, vector<128x32xbf16>
    %c0_1 = arith.constant 0 : index
    %c0_2 = arith.constant 0 : index
    %1 = vector.load %arg2[%c0_1, %c0_2] : memref<32x128xbf16, #tpu.memory_space<vmem>>, vector<32x128xbf16>
    %cst = arith.constant dense<0.000000e+00> : vector<128x128xf32>
    %2 = tpu.matmul %0, %1, %cst {dimension_numbers = #tpu.dot_dimension_numbers<[1], [0], [0], [1], [0, 0, 1, 1], [], []>} : vector<128x32xbf16>, vector<32x128xbf16>, vector<128x128xf32> -> vector<128x128xf32>
    %c0_3 = arith.constant 0 : index
    %c0_4 = arith.constant 0 : index
    %3 = vector.load %arg3[%c0_3, %c0_4] : memref<1x128xf32, #tpu.memory_space<vmem>>, vector<1x128xf32>
    %4 = vector.broadcast %3 : vector<1x128xf32> to vector<128x128xf32>
    %5 = arith.addf %2, %4 : vector<128x128xf32>
    %cst_5 = arith.constant 0.000000e+00 : f32
    %6 = vector.broadcast %cst_5 : f32 to vector<128x128xf32>
    %7 = arith.cmpf ogt, %5, %6 : vector<128x128xf32>
    %cst_6 = arith.constant 0.00999999977 : f32
    %8 = vector.broadcast %cst_6 : f32 to vector<128x128xf32>
    %9 = arith.mulf %8, %5 : vector<128x128xf32>
    %10 = arith.select %7, %5, %9 : vector<128x128xi1>, vector<128x128xf32>
    %11 = arith.truncf %10 : vector<128x128xf32> to vector<128x128xbf16>
    %c0_7 = arith.constant 0 : index
    %c0_8 = arith.constant 0 : index
    %12 = vector.load %arg4[%c0_7, %c0_8] : memref<128x128xbf16, #tpu.memory_space<vmem>>, vector<128x128xbf16>
    %cst_9 = arith.constant dense<0.000000e+00> : vector<128x128xf32>
    %13 = tpu.matmul %11, %12, %cst_9 {dimension_numbers = #tpu.dot_dimension_numbers<[1], [0], [0], [1], [0, 0, 1, 1], [], []>} : vector<128x128xbf16>, vector<128x128xbf16>, vector<128x128xf32> -> vector<128x128xf32>
    %c0_10 = arith.constant 0 : index
    %c0_11 = arith.constant 0 : index
    %14 = vector.load %arg5[%c0_10, %c0_11] : memref<1x128xf32, #tpu.memory_space<vmem>>, vector<1x128xf32>
    %15 = vector.broadcast %14 : vector<1x128xf32> to vector<128x128xf32>
    %16 = arith.addf %13, %15 : vector<128x128xf32>
    %cst_12 = arith.constant 0.000000e+00 : f32
    %17 = vector.broadcast %cst_12 : f32 to vector<128x128xf32>
    %18 = arith.cmpf ogt, %16, %17 : vector<128x128xf32>
    %cst_13 = arith.constant 0.00999999977 : f32
    %19 = vector.broadcast %cst_13 : f32 to vector<128x128xf32>
    %20 = arith.mulf %19, %16 : vector<128x128xf32>
    %21 = arith.select %18, %16, %20 : vector<128x128xi1>, vector<128x128xf32>
    %22 = arith.truncf %21 : vector<128x128xf32> to vector<128x128xbf16>
    %c0_14 = arith.constant 0 : index
    %c0_15 = arith.constant 0 : index
    %23 = vector.load %arg6[%c0_14, %c0_15] : memref<128x128xbf16, #tpu.memory_space<vmem>>, vector<128x128xbf16>
    %cst_16 = arith.constant dense<0.000000e+00> : vector<128x128xf32>
    %24 = tpu.matmul %22, %23, %cst_16 {dimension_numbers = #tpu.dot_dimension_numbers<[1], [0], [0], [1], [0, 0, 1, 1], [], []>} : vector<128x128xbf16>, vector<128x128xbf16>, vector<128x128xf32> -> vector<128x128xf32>
    %c0_17 = arith.constant 0 : index
    %c0_18 = arith.constant 0 : index
    %25 = vector.load %arg7[%c0_17, %c0_18] : memref<1x128xf32, #tpu.memory_space<vmem>>, vector<1x128xf32>
    %26 = vector.broadcast %25 : vector<1x128xf32> to vector<128x128xf32>
    %27 = arith.addf %24, %26 : vector<128x128xf32>
    %cst_19 = arith.constant 0.000000e+00 : f32
    %28 = vector.broadcast %cst_19 : f32 to vector<128x128xf32>
    %29 = arith.cmpf ogt, %27, %28 : vector<128x128xf32>
    %cst_20 = arith.constant 0.00999999977 : f32
    %30 = vector.broadcast %cst_20 : f32 to vector<128x128xf32>
    %31 = arith.mulf %30, %27 : vector<128x128xf32>
    %32 = arith.select %29, %27, %31 : vector<128x128xi1>, vector<128x128xf32>
    %33 = arith.truncf %32 : vector<128x128xf32> to vector<128x128xbf16>
    %c0_21 = arith.constant 0 : index
    %c0_22 = arith.constant 0 : index
    %34 = vector.load %arg8[%c0_21, %c0_22] : memref<128x128xbf16, #tpu.memory_space<vmem>>, vector<128x128xbf16>
    %cst_23 = arith.constant dense<0.000000e+00> : vector<128x128xf32>
    %35 = tpu.matmul %33, %34, %cst_23 {dimension_numbers = #tpu.dot_dimension_numbers<[1], [0], [0], [1], [0, 0, 1, 1], [], []>} : vector<128x128xbf16>, vector<128x128xbf16>, vector<128x128xf32> -> vector<128x128xf32>
    %c0_24 = arith.constant 0 : index
    %c0_25 = arith.constant 0 : index
    %36 = vector.load %arg9[%c0_24, %c0_25] : memref<1x128xf32, #tpu.memory_space<vmem>>, vector<1x128xf32>
    %37 = vector.broadcast %36 : vector<1x128xf32> to vector<128x128xf32>
    %38 = arith.addf %35, %37 : vector<128x128xf32>
    %cst_26 = arith.constant 0.000000e+00 : f32
    %39 = vector.broadcast %cst_26 : f32 to vector<128x128xf32>
    %40 = arith.cmpf ogt, %38, %39 : vector<128x128xf32>
    %cst_27 = arith.constant 0.00999999977 : f32
    %41 = vector.broadcast %cst_27 : f32 to vector<128x128xf32>
    %42 = arith.mulf %41, %38 : vector<128x128xf32>
    %43 = arith.select %40, %38, %42 : vector<128x128xi1>, vector<128x128xf32>
    %44 = arith.truncf %43 : vector<128x128xf32> to vector<128x128xbf16>
    %c0_28 = arith.constant 0 : index
    %c0_29 = arith.constant 0 : index
    %45 = vector.load %arg10[%c0_28, %c0_29] : memref<128x128xbf16, #tpu.memory_space<vmem>>, vector<128x128xbf16>
    %cst_30 = arith.constant dense<0.000000e+00> : vector<128x128xf32>
    %46 = tpu.matmul %44, %45, %cst_30 {dimension_numbers = #tpu.dot_dimension_numbers<[1], [0], [0], [1], [0, 0, 1, 1], [], []>} : vector<128x128xbf16>, vector<128x128xbf16>, vector<128x128xf32> -> vector<128x128xf32>
    %c0_31 = arith.constant 0 : index
    %c0_32 = arith.constant 0 : index
    %47 = vector.load %arg11[%c0_31, %c0_32] : memref<1x128xf32, #tpu.memory_space<vmem>>, vector<1x128xf32>
    %48 = vector.broadcast %47 : vector<1x128xf32> to vector<128x128xf32>
    %49 = arith.addf %46, %48 : vector<128x128xf32>
    %cst_33 = arith.constant dense<0xFF800000> : vector<128xf32>
    %50 = vector.multi_reduction <maximumf>, %49, %cst_33 [1] : vector<128x128xf32> to vector<128xf32>
    %51 = vector.shape_cast %50 : vector<128xf32> to vector<128x1xf32>
    %52 = vector.broadcast %51 : vector<128x1xf32> to vector<128x128xf32>
    %53 = arith.subf %49, %52 : vector<128x128xf32>
    %54 = math.exp %53 : vector<128x128xf32>
    %cst_34 = arith.constant dense<0.000000e+00> : vector<128xf32>
    %55 = vector.multi_reduction <add>, %54, %cst_34 [1] : vector<128x128xf32> to vector<128xf32>
    %56 = vector.shape_cast %55 : vector<128xf32> to vector<128x1xf32>
    %57 = tpu.reciprocal %56 {approx = true} : vector<128x1xf32> -> vector<128x1xf32>
    %58 = vector.broadcast %57 : vector<128x1xf32> to vector<128x128xf32>
    %59 = arith.mulf %54, %58 : vector<128x128xf32>
    %c0_35 = arith.constant 0 : index
    %c0_36 = arith.constant 0 : index
    %60 = vector.load %arg12[%c0_35, %c0_36] : memref<128x128xf32, #tpu.memory_space<vmem>>, vector<128x128xf32>
    tpu.vector_store %arg12[%c0_35, %c0_36], %59 {strides = array<i32>} : memref<128x128xf32, #tpu.memory_space<vmem>>, vector<128x128xf32>,
    return
  }
  func.func @transform_0(%arg0: i32) -> (i32, i32) {
    %c0_i32 = arith.constant 0 : i32
    %c0_i32_0 = arith.constant 0 : i32
    return %arg0, %c0_i32 : i32, i32
  }
  func.func @transform_1(%arg0: i32) -> (i32, i32) {
    %c0_i32 = arith.constant 0 : i32
    %c0_i32_0 = arith.constant 0 : i32
    %c0_i32_1 = arith.constant 0 : i32
    return %c0_i32, %c0_i32_0 : i32, i32
  }
  func.func @transform_2(%arg0: i32) -> (i32, i32) {
    %c0_i32 = arith.constant 0 : i32
    %c0_i32_0 = arith.constant 0 : i32
    %c0_i32_1 = arith.constant 0 : i32
    return %c0_i32, %c0_i32_0 : i32, i32
  }
  func.func @transform_3(%arg0: i32) -> (i32, i32) {
    %c0_i32 = arith.constant 0 : i32
    %c0_i32_0 = arith.constant 0 : i32
    %c0_i32_1 = arith.constant 0 : i32
    return %c0_i32, %c0_i32_0 : i32, i32
  }
  func.func @transform_4(%arg0: i32) -> (i32, i32) {
    %c0_i32 = arith.constant 0 : i32
    %c0_i32_0 = arith.constant 0 : i32
    %c0_i32_1 = arith.constant 0 : i32
    return %c0_i32, %c0_i32_0 : i32, i32
  }
  func.func @transform_5(%arg0: i32) -> (i32, i32) {
    %c0_i32 = arith.constant 0 : i32
    %c0_i32_0 = arith.constant 0 : i32
    %c0_i32_1 = arith.constant 0 : i32
    return %c0_i32, %c0_i32_0 : i32, i32
  }
  func.func @transform_6(%arg0: i32) -> (i32, i32) {
    %c0_i32 = arith.constant 0 : i32
    %c0_i32_0 = arith.constant 0 : i32
    %c0_i32_1 = arith.constant 0 : i32
    return %c0_i32, %c0_i32_0 : i32, i32
  }
  func.func @transform_7(%arg0: i32) -> (i32, i32) {
    %c0_i32 = arith.constant 0 : i32
    %c0_i32_0 = arith.constant 0 : i32
    %c0_i32_1 = arith.constant 0 : i32
    return %c0_i32, %c0_i32_0 : i32, i32
  }
  func.func @transform_8(%arg0: i32) -> (i32, i32) {
    %c0_i32 = arith.constant 0 : i32
    %c0_i32_0 = arith.constant 0 : i32
    %c0_i32_1 = arith.constant 0 : i32
    return %c0_i32, %c0_i32_0 : i32, i32
  }
  func.func @transform_9(%arg0: i32) -> (i32, i32) {
    %c0_i32 = arith.constant 0 : i32
    %c0_i32_0 = arith.constant 0 : i32
    %c0_i32_1 = arith.constant 0 : i32
    return %c0_i32, %c0_i32_0 : i32, i32
  }
  func.func @transform_10(%arg0: i32) -> (i32, i32) {
    %c0_i32 = arith.constant 0 : i32
    %c0_i32_0 = arith.constant 0 : i32
    %c0_i32_1 = arith.constant 0 : i32
    return %c0_i32, %c0_i32_0 : i32, i32
  }
  func.func @transform_11(%arg0: i32) -> (i32, i32) {
    %c0_i32 = arith.constant 0 : i32
    %c0_i32_0 = arith.constant 0 : i32
    return %arg0, %c0_i32 : i32, i32
  }
}

</mosaic_0001>

<llo_original>
// kernel: tpu_custom_call.1
$region0: #{tpu_custom_call.1}
  #allocation0 [shape = 'u32[]', space=smem, size = 0x4, offset = 0x4, fixed_abs, tag = 'smem constant byte address 0x4 - core index']
  #allocation1 [shape = 'u32[144,128]{1,0:T(1,128)}', space=vmem, size = 0x12000, scoped, tag = 'internal scratch']
  %s0 = inlined_call_operand.vmem [shape: bf16[256,32], index: 0, kind: input, shape index: {}]
  %s1 = inlined_call_operand.hbm [shape: bf16[32,128], index: 1, kind: input, shape index: {}]
  %s2 = inlined_call_operand.vmem [shape: f32[1,128], index: 2, kind: input, shape index: {}]
  %s3 = inlined_call_operand.vmem [shape: bf16[128,128], index: 3, kind: input, shape index: {}]
  %s4 = inlined_call_operand.vmem [shape: f32[1,128], index: 4, kind: input, shape index: {}]
  %s5 = inlined_call_operand.vmem [shape: bf16[128,128], index: 5, kind: input, shape index: {}]
  %s6 = inlined_call_operand.hbm [shape: f32[1,128], index: 6, kind: input, shape index: {}]
  %s7 = inlined_call_operand.hbm [shape: bf16[128,128], index: 7, kind: input, shape index: {}]
  %s8 = inlined_call_operand.hbm [shape: f32[1,128], index: 8, kind: input, shape index: {}]
  %s9 = inlined_call_operand.vmem [shape: bf16[128,128], index: 9, kind: input, shape index: {}]
  %s10 = inlined_call_operand.vmem [shape: f32[1,128], index: 10, kind: input, shape index: {}]
  %s11 = inlined_call_operand.hbm [shape: f32[256,128], index: 11, kind: output, shape index: {}]
  %s12 = sld [smem:[#allocation0]]
  $region93: #{tpu_custom_call.1} parent=0
    _
  %s14 = ssub.s32 1, %s12
  %s15 = scalar_select 0, %s14, %s12
  $region1: #{tpu_custom_call.1} parent=0
    #allocation2 [shape = 'u8[8192]{0}', space=vmem, size = 0x2000, scoped, tag = 'input window, operand 1, single buffered']
    #allocation3 [shape = 's32[2]{0}', space=sflag, size = 0x8, scoped, tag = 'scoped memory for tpu_custom_call.1']
    #allocation4 [shape = 's32[2]{0}', space=sflag, size = 0x8, scoped, tag = 'scoped memory for tpu_custom_call.1']
    #allocation5 [shape = 'u8[512]{0}', space=vmem, size = 0x400, scoped, tag = 'input window, operand 6, single buffered']
    #allocation6 [shape = 's32[1]{0}', space=sflag, size = 0x4, scoped, tag = 'scoped memory for tpu_custom_call.1']
    #allocation7 [shape = 'u8[32768]{0}', space=vmem, size = 0x8000, scoped, tag = 'input window, operand 7, single buffered']
    #allocation8 [shape = 'u8[512]{0}', space=vmem, size = 0x400, scoped, tag = 'input window, operand 8, single buffered']
    #allocation9 [shape = 's32[1]{0}', space=sflag, size = 0x4, scoped, tag = 'scoped memory for tpu_custom_call.1']
    #allocation10 [shape = 'u8[131072]{0}', space=vmem, size = 0x20000, scoped, tag = 'output window, operand 0']
    %16 = vsyncpa [#allocation3], 0
    %17 = vsyncpa [#allocation6], 0
    %18 = vsyncpa [#allocation9], 0
    %19 = vsyncpa [#allocation4], 0
    %s20 = scalar_lea.sflag [#allocation4], 1
    %21 = vsyncpa %s20, 0
    loop: start=0, step=1, limit=4
    $region2: #{tpu_custom_call.1} parent=1 // loop_pre_header
      _
    $region3: #{tpu_custom_call.1} parent=1 // loop_header
      %s23 = sphi 0, %s27
      %p24 = scmp.ge.s32.totalorder %s23, 4
      %s33 = sphi 0, %s35
      %s36 = sphi 0, %s33
      %s37 = sphi 0, %s36
      %s53 = sphi 0, %s37
      %s57 = sphi 0, %s57
      %s59 = sphi 0, %s57
      %s60 = sphi 0, %s59
      %s74 = sphi 0, %s60
      %s78 = sphi 0, %s78
      %s80 = sphi 0, %s78
      %s81 = sphi 0, %s80
      %s95 = sphi 0, %s81
      %s99 = sphi 0, %s99
      %s101 = sphi 0, %s99
      %s102 = sphi 0, %s101
      %s116 = sphi 0, %s102
      %s120 = sphi 0, %s120
      %s122 = sphi 0, %s120
      %s123 = sphi 0, %s122
      %s137 = sphi 0, %s123
      %s141 = sphi 0, %s141
      %s143 = sphi 0, %s141
      %s144 = sphi 0, %s143
      %s158 = sphi 0, %s144
      %s162 = sphi 0, %s162
      %s164 = sphi 0, %s162
      %s165 = sphi 0, %s164
      %s179 = sphi 0, %s165
      %s183 = sphi 0, %s183
      %s185 = sphi 0, %s183
      %s186 = sphi 0, %s185
      %s200 = sphi 0, %s186
      %s204 = sphi 0, %s204
      %s206 = sphi 0, %s204
      %s207 = sphi 0, %s206
      %s221 = sphi 0, %s207
      %s225 = sphi 0, %s225
      %s227 = sphi 0, %s225
      %s228 = sphi 0, %s227
      %s242 = sphi 0, %s228
      %s246 = sphi 0, %s246
      %s248 = sphi 0, %s246
      %s249 = sphi 0, %s248
      %s263 = sphi 0, %s249
      %s269 = sphi 0, %s271
      %s272 = sphi 0, %s269
      %s273 = sphi 0, %s272
      %s289 = sphi 0, %s273
    $region4: #{tpu_custom_call.1} parent=1 // loop_header_branch
      %26 = sbr.rel (%p24) target = $region8
    $region5: #{tpu_custom_call.1} parent=1 // loop_body
      %s28 = ssub.s32 %s23, 1
      %s29 = ssub.s32 %s23, 2
      %s30 = sadd.s32 %s23, 1
      %s31 = ssub.s32 %s23, %s30
      %p32 = scmp.eq.s32.totalorder %s31, 0
      %s34 = sadd.s32 %s33, 1
      %s35 = scalar_select %p32, %s33, %s34
      %p38 = pneg %p32
      %p39 = scmp.eq.s32.totalorder %s23, 1
      %p40 = por %p38, %p39
      %p41 = scmp.ne.s32.totalorder %s33, %s36
      %p42 = scmp.eq.s32.totalorder %s23, 0
      %p43 = por %p41, %p42
      %p44 = scmp.ne.s32.totalorder %s33, %s36
      %p45 = scmp.eq.s32.totalorder %s28, 1
      %p46 = por %p44, %p45
      %p47 = scmp.ne.s32.totalorder %s36, %s37
      %p48 = scmp.eq.s32.totalorder %s28, 0
      %p49 = por %p47, %p48
      %p50 = scmp.ne.s32.totalorder %s36, %s37
      %p51 = scmp.eq.s32.totalorder %s29, 1
      %p52 = por %p50, %p51
      %p54 = scmp.ne.s32.totalorder %s37, %s53
      %p55 = scmp.eq.s32.totalorder %s29, 0
      %p56 = por %p54, %p55
      %s58 = sadd.s32 %s57, 1
      %p61 = scmp.eq.s32.totalorder %s23, 1
      %p62 = scmp.ne.s32.totalorder %s57, %s59
      %p63 = scmp.eq.s32.totalorder %s23, 0
      %p64 = por %p62, %p63
      %p65 = scmp.ne.s32.totalorder %s57, %s59
      %p66 = scmp.eq.s32.totalorder %s28, 1
      %p67 = por %p65, %p66
      %p68 = scmp.ne.s32.totalorder %s59, %s60
      %p69 = scmp.eq.s32.totalorder %s28, 0
      %p70 = por %p68, %p69
      %p71 = scmp.ne.s32.totalorder %s59, %s60
      %p72 = scmp.eq.s32.totalorder %s29, 1
      %p73 = por %p71, %p72
      %p75 = scmp.ne.s32.totalorder %s60, %s74
      %p76 = scmp.eq.s32.totalorder %s29, 0
      %p77 = por %p75, %p76
      %s79 = sadd.s32 %s78, 1
      %p82 = scmp.eq.s32.totalorder %s23, 1
      %p83 = scmp.ne.s32.totalorder %s78, %s80
      %p84 = scmp.eq.s32.totalorder %s23, 0
      %p85 = por %p83, %p84
      %p86 = scmp.ne.s32.totalorder %s78, %s80
      %p87 = scmp.eq.s32.totalorder %s28, 1
      %p88 = por %p86, %p87
      %p89 = scmp.ne.s32.totalorder %s80, %s81
      %p90 = scmp.eq.s32.totalorder %s28, 0
      %p91 = por %p89, %p90
      %p92 = scmp.ne.s32.totalorder %s80, %s81
      %p93 = scmp.eq.s32.totalorder %s29, 1
      %p94 = por %p92, %p93
      %p96 = scmp.ne.s32.totalorder %s81, %s95
      %p97 = scmp.eq.s32.totalorder %s29, 0
      %p98 = por %p96, %p97
      %s100 = sadd.s32 %s99, 1
      %p103 = scmp.eq.s32.totalorder %s23, 1
      %p104 = scmp.ne.s32.totalorder %s99, %s101
      %p105 = scmp.eq.s32.totalorder %s23, 0
      %p106 = por %p104, %p105
      %p107 = scmp.ne.s32.totalorder %s99, %s101
      %p108 = scmp.eq.s32.totalorder %s28, 1
      %p109 = por %p107, %p108
      %p110 = scmp.ne.s32.totalorder %s101, %s102
      %p111 = scmp.eq.s32.totalorder %s28, 0
      %p112 = por %p110, %p111
      %p113 = scmp.ne.s32.totalorder %s101, %s102
      %p114 = scmp.eq.s32.totalorder %s29, 1
      %p115 = por %p113, %p114
      %p117 = scmp.ne.s32.totalorder %s102, %s116
      %p118 = scmp.eq.s32.totalorder %s29, 0
      %p119 = por %p117, %p118
      %s121 = sadd.s32 %s120, 1
      %p124 = scmp.eq.s32.totalorder %s23, 1
      %p125 = scmp.ne.s32.totalorder %s120, %s122
      %p126 = scmp.eq.s32.totalorder %s23, 0
      %p127 = por %p125, %p126
      %p128 = scmp.ne.s32.totalorder %s120, %s122
      %p129 = scmp.eq.s32.totalorder %s28, 1
      %p130 = por %p128, %p129
      %p131 = scmp.ne.s32.totalorder %s122, %s123
      %p132 = scmp.eq.s32.totalorder %s28, 0
      %p133 = por %p131, %p132
      %p134 = scmp.ne.s32.totalorder %s122, %s123
      %p135 = scmp.eq.s32.totalorder %s29, 1
      %p136 = por %p134, %p135
      %p138 = scmp.ne.s32.totalorder %s123, %s137
      %p139 = scmp.eq.s32.totalorder %s29, 0
      %p140 = por %p138, %p139
      %s142 = sadd.s32 %s141, 1
      %p145 = scmp.eq.s32.totalorder %s23, 1
      %p146 = scmp.ne.s32.totalorder %s141, %s143
      %p147 = scmp.eq.s32.totalorder %s23, 0
      %p148 = por %p146, %p147
      %p149 = scmp.ne.s32.totalorder %s141, %s143
      %p150 = scmp.eq.s32.totalorder %s28, 1
      %p151 = por %p149, %p150
      %p152 = scmp.ne.s32.totalorder %s143, %s144
      %p153 = scmp.eq.s32.totalorder %s28, 0
      %p154 = por %p152, %p153
      %p155 = scmp.ne.s32.totalorder %s143, %s144
      %p156 = scmp.eq.s32.totalorder %s29, 1
      %p157 = por %p155, %p156
      %p159 = scmp.ne.s32.totalorder %s144, %s158
      %p160 = scmp.eq.s32.totalorder %s29, 0
      %p161 = por %p159, %p160
      %s163 = sadd.s32 %s162, 1
      %p166 = scmp.eq.s32.totalorder %s23, 1
      %p167 = scmp.ne.s32.totalorder %s162, %s164
      %p168 = scmp.eq.s32.totalorder %s23, 0
      %p169 = por %p167, %p168
      %p170 = scmp.ne.s32.totalorder %s162, %s164
      %p171 = scmp.eq.s32.totalorder %s28, 1
      %p172 = por %p170, %p171
      %p173 = scmp.ne.s32.totalorder %s164, %s165
      %p174 = scmp.eq.s32.totalorder %s28, 0
      %p175 = por %p173, %p174
      %p176 = scmp.ne.s32.totalorder %s164, %s165
      %p177 = scmp.eq.s32.totalorder %s29, 1
      %p178 = por %p176, %p177
      %p180 = scmp.ne.s32.totalorder %s165, %s179
      %p181 = scmp.eq.s32.totalorder %s29, 0
      %p182 = por %p180, %p181
      %s184 = sadd.s32 %s183, 1
      %p187 = scmp.eq.s32.totalorder %s23, 1
      %p188 = scmp.ne.s32.totalorder %s183, %s185
      %p189 = scmp.eq.s32.totalorder %s23, 0
      %p190 = por %p188, %p189
      %p191 = scmp.ne.s32.totalorder %s183, %s185
      %p192 = scmp.eq.s32.totalorder %s28, 1
      %p193 = por %p191, %p192
      %p194 = scmp.ne.s32.totalorder %s185, %s186
      %p195 = scmp.eq.s32.totalorder %s28, 0
      %p196 = por %p194, %p195
      %p197 = scmp.ne.s32.totalorder %s185, %s186
      %p198 = scmp.eq.s32.totalorder %s29, 1
      %p199 = por %p197, %p198
      %p201 = scmp.ne.s32.totalorder %s186, %s200
      %p202 = scmp.eq.s32.totalorder %s29, 0
      %p203 = por %p201, %p202
      %s205 = sadd.s32 %s204, 1
      %p208 = scmp.eq.s32.totalorder %s23, 1
      %p209 = scmp.ne.s32.totalorder %s204, %s206
      %p210 = scmp.eq.s32.totalorder %s23, 0
      %p211 = por %p209, %p210
      %p212 = scmp.ne.s32.totalorder %s204, %s206
      %p213 = scmp.eq.s32.totalorder %s28, 1
      %p214 = por %p212, %p213
      %p215 = scmp.ne.s32.totalorder %s206, %s207
      %p216 = scmp.eq.s32.totalorder %s28, 0
      %p217 = por %p215, %p216
      %p218 = scmp.ne.s32.totalorder %s206, %s207
      %p219 = scmp.eq.s32.totalorder %s29, 1
      %p220 = por %p218, %p219
      %p222 = scmp.ne.s32.totalorder %s207, %s221
      %p223 = scmp.eq.s32.totalorder %s29, 0
      %p224 = por %p222, %p223
      %s226 = sadd.s32 %s225, 1
      %p229 = scmp.eq.s32.totalorder %s23, 1
      %p230 = scmp.ne.s32.totalorder %s225, %s227
      %p231 = scmp.eq.s32.totalorder %s23, 0
      %p232 = por %p230, %p231
      %p233 = scmp.ne.s32.totalorder %s225, %s227
      %p234 = scmp.eq.s32.totalorder %s28, 1
      %p235 = por %p233, %p234
      %p236 = scmp.ne.s32.totalorder %s227, %s228
      %p237 = scmp.eq.s32.totalorder %s28, 0
      %p238 = por %p236, %p237
      %p239 = scmp.ne.s32.totalorder %s227, %s228
      %p240 = scmp.eq.s32.totalorder %s29, 1
      %p241 = por %p239, %p240
      %p243 = scmp.ne.s32.totalorder %s228, %s242
      %p244 = scmp.eq.s32.totalorder %s29, 0
      %p245 = por %p243, %p244
      %s247 = sadd.s32 %s246, 1
      %p250 = scmp.eq.s32.totalorder %s23, 1
      %p251 = scmp.ne.s32.totalorder %s246, %s248
      %p252 = scmp.eq.s32.totalorder %s23, 0
      %p253 = por %p251, %p252
      %p254 = scmp.ne.s32.totalorder %s246, %s248
      %p255 = scmp.eq.s32.totalorder %s28, 1
      %p256 = por %p254, %p255
      %p257 = scmp.ne.s32.totalorder %s248, %s249
      %p258 = scmp.eq.s32.totalorder %s28, 0
      %p259 = por %p257, %p258
      %p260 = scmp.ne.s32.totalorder %s248, %s249
      %p261 = scmp.eq.s32.totalorder %s29, 1
      %p262 = por %p260, %p261
      %p264 = scmp.ne.s32.totalorder %s249, %s263
      %p265 = scmp.eq.s32.totalorder %s29, 0
      %p266 = por %p264, %p265
      %s267 = ssub.s32 %s23, %s30
      %p268 = scmp.eq.s32.totalorder %s267, 0
      %s270 = sadd.s32 %s269, 1
      %s271 = scalar_select %p268, %s269, %s270
      %p274 = pneg %p268
      %p275 = scmp.eq.s32.totalorder %s23, 1
      %p276 = por %p274, %p275
      %p277 = scmp.ne.s32.totalorder %s269, %s272
      %p278 = scmp.eq.s32.totalorder %s23, 0
      %p279 = por %p277, %p278
      %p280 = scmp.ne.s32.totalorder %s269, %s272
      %p281 = scmp.eq.s32.totalorder %s28, 1
      %p282 = por %p280, %p281
      %p283 = scmp.ne.s32.totalorder %s272, %s273
      %p284 = scmp.eq.s32.totalorder %s28, 0
      %p285 = por %p283, %p284
      %p286 = scmp.ne.s32.totalorder %s272, %s273
      %p287 = scmp.eq.s32.totalorder %s29, 1
      %p288 = por %p286, %p287
      %p290 = scmp.ne.s32.totalorder %s273, %s289
      %p291 = scmp.eq.s32.totalorder %s29, 0
      %p292 = por %p290, %p291
      %p293 = scmp.le.s32.totalorder 1, %s23
      %p294 = scmp.lt.s32.totalorder %s23, 3
      %p295 = pnand %p293, %p294
      %p296 = pneg %p295
      // Predicated region
      $region9: #{tpu_custom_call.1} parent=5 // pred_check
        _
      $region10: #{tpu_custom_call.1} parent=5 // pred_check_branch
        %298 = sbr.rel (%p295) target = $region12
      $region11: #{tpu_custom_call.1} parent=5 // pred_region
        %s299 = ssub.s32 %s23, 1
        // Predicated region
        $region13: #{tpu_custom_call.1} parent=11 // pred_check
          %p300 = pneg %p70
        $region14: #{tpu_custom_call.1} parent=11 // pred_check_branch
          %302 = sbr.rel (%p300) target = $region16
        $region15: #{tpu_custom_call.1} parent=11 // pred_region
          %s304 = ssub.s32 256, 256
          %305 = vsyncadd [#allocation3], %s304
          %s306 = sshll.u32 [#allocation2], 4
          %s307 = int_to_ptr.vmem [resolvable:$true] %s306
          %312 = dma.hbm_to_vmem [thread:$0]  %s1, 256, %s307, [#allocation3], 64, 64, 4
        $region16: #{tpu_custom_call.1} parent=11 // pred_fallthru
          _
        // Predicated region
        $region17: #{tpu_custom_call.1} parent=11 // pred_check
          %p313 = pneg %p91
        $region18: #{tpu_custom_call.1} parent=11 // pred_check_branch
          %315 = sbr.rel (%p313) target = $region20
        $region19: #{tpu_custom_call.1} parent=11 // pred_region
          _
        $region20: #{tpu_custom_call.1} parent=11 // pred_fallthru
          _
        // Predicated region
        $region21: #{tpu_custom_call.1} parent=11 // pred_check
          %p316 = pneg %p112
        $region22: #{tpu_custom_call.1} parent=11 // pred_check_branch
          %318 = sbr.rel (%p316) target = $region24
        $region23: #{tpu_custom_call.1} parent=11 // pred_region
          _
        $region24: #{tpu_custom_call.1} parent=11 // pred_fallthru
          _
        // Predicated region
        $region25: #{tpu_custom_call.1} parent=11 // pred_check
          %p319 = pneg %p133
        $region26: #{tpu_custom_call.1} parent=11 // pred_check_branch
          %321 = sbr.rel (%p319) target = $region28
        $region27: #{tpu_custom_call.1} parent=11 // pred_region
          _
        $region28: #{tpu_custom_call.1} parent=11 // pred_fallthru
          _
        // Predicated region
        $region29: #{tpu_custom_call.1} parent=11 // pred_check
          %p322 = pneg %p154
        $region30: #{tpu_custom_call.1} parent=11 // pred_check_branch
          %324 = sbr.rel (%p322) target = $region32
        $region31: #{tpu_custom_call.1} parent=11 // pred_region
          _
        $region32: #{tpu_custom_call.1} parent=11 // pred_fallthru
          _
        // Predicated region
        $region33: #{tpu_custom_call.1} parent=11 // pred_check
          %p325 = pneg %p175
        $region34: #{tpu_custom_call.1} parent=11 // pred_check_branch
          %327 = sbr.rel (%p325) target = $region36
        $region35: #{tpu_custom_call.1} parent=11 // pred_region
          %s329 = ssub.s32 16, 16
          %330 = vsyncadd [#allocation6], %s329
          %s332 = sshll.u32 [#allocation5], 4
          %s333 = int_to_ptr.vmem [resolvable:$true] %s332
          %335 = dma.hbm_to_vmem [thread:$0]  %s6, 16, %s333, [#allocation6]
        $region36: #{tpu_custom_call.1} parent=11 // pred_fallthru
          _
        // Predicated region
        $region37: #{tpu_custom_call.1} parent=11 // pred_check
          %p336 = pneg %p196
        $region38: #{tpu_custom_call.1} parent=11 // pred_check_branch
          %338 = sbr.rel (%p336) target = $region40
        $region39: #{tpu_custom_call.1} parent=11 // pred_region
          %s340 = ssub.s32 1024, 1024
          %341 = vsyncadd [#allocation6], %s340
          %s342 = sshll.u32 [#allocation7], 4
          %s343 = int_to_ptr.vmem [resolvable:$true] %s342
          %348 = dma.hbm_to_vmem [thread:$0]  %s7, 1024, %s343, [#allocation6], 64, 64, 4
        $region40: #{tpu_custom_call.1} parent=11 // pred_fallthru
          _
        // Predicated region
        $region41: #{tpu_custom_call.1} parent=11 // pred_check
          %p349 = pneg %p217
        $region42: #{tpu_custom_call.1} parent=11 // pred_check_branch
          %351 = sbr.rel (%p349) target = $region44
        $region43: #{tpu_custom_call.1} parent=11 // pred_region
          %s353 = ssub.s32 16, 16
          %354 = vsyncadd [#allocation9], %s353
          %s356 = sshll.u32 [#allocation8], 4
          %s357 = int_to_ptr.vmem [resolvable:$true] %s356
          %359 = dma.hbm_to_vmem [thread:$0]  %s8, 16, %s357, [#allocation9]
        $region44: #{tpu_custom_call.1} parent=11 // pred_fallthru
          _
        // Predicated region
        $region45: #{tpu_custom_call.1} parent=11 // pred_check
          %p360 = pneg %p238
        $region46: #{tpu_custom_call.1} parent=11 // pred_check_branch
          %362 = sbr.rel (%p360) target = $region48
        $region47: #{tpu_custom_call.1} parent=11 // pred_region
          _
        $region48: #{tpu_custom_call.1} parent=11 // pred_fallthru
          _
        // Predicated region
        $region49: #{tpu_custom_call.1} parent=11 // pred_check
          %p363 = pneg %p259
        $region50: #{tpu_custom_call.1} parent=11 // pred_check_branch
          %365 = sbr.rel (%p363) target = $region52
        $region51: #{tpu_custom_call.1} parent=11 // pred_region
          _
        $region52: #{tpu_custom_call.1} parent=11 // pred_fallthru
          _
      $region12: #{tpu_custom_call.1} parent=5 // pred_fallthru
        _
      %p366 = scmp.lt.s32.totalorder %s23, 2
      // Predicated region
      $region53: #{tpu_custom_call.1} parent=5 // pred_check
        %p367 = pneg %p366
      $region54: #{tpu_custom_call.1} parent=5 // pred_check_branch
        %369 = sbr.rel (%p367) target = $region56
      $region55: #{tpu_custom_call.1} parent=5 // pred_region
        // Predicated region
        $region57: #{tpu_custom_call.1} parent=55 // pred_check
          %p370 = pneg %p43
        $region58: #{tpu_custom_call.1} parent=55 // pred_check_branch
          %372 = sbr.rel (%p370) target = $region60
        $region59: #{tpu_custom_call.1} parent=55 // pred_region
          %s373 = smul.u32 16, %s23
          %p374 = scmp.lt.s32.totalorder %s373, 31
          %s375 = scalar_select %p374, %s373, 31
          %s376 = smul.addr %s375, 4
          %s377 = scalar_lea.vmem %s0, %s376
          %s378 = smul.u32 16, %s23
        $region60: #{tpu_custom_call.1} parent=55 // pred_fallthru
          _
      $region56: #{tpu_custom_call.1} parent=5 // pred_fallthru
        _
      %p379 = scmp.le.s32.totalorder 1, %s23
      %p380 = scmp.lt.s32.totalorder %s23, 3
      %p381 = pnand %p379, %p380
      %p382 = pneg %p381
      // Predicated region
      $region61: #{tpu_custom_call.1} parent=5 // pred_check
        _
      $region62: #{tpu_custom_call.1} parent=5 // pred_check_branch
        %384 = sbr.rel (%p381) target = $region64
      $region63: #{tpu_custom_call.1} parent=5 // pred_region
        %s385 = ssub.s32 %s23, 1
        // Predicated region
        $region65: #{tpu_custom_call.1} parent=63 // pred_check
          %p386 = pneg %p70
        $region66: #{tpu_custom_call.1} parent=63 // pred_check_branch
          %388 = sbr.rel (%p386) target = $region68
        $region67: #{tpu_custom_call.1} parent=63 // pred_region
          %389 = dma.done [#allocation3], 256
        $region68: #{tpu_custom_call.1} parent=63 // pred_fallthru
          _
        // Predicated region
        $region69: #{tpu_custom_call.1} parent=63 // pred_check
          %p390 = pneg %p175
        $region70: #{tpu_custom_call.1} parent=63 // pred_check_branch
          %392 = sbr.rel (%p390) target = $region72
        $region71: #{tpu_custom_call.1} parent=63 // pred_region
          %393 = dma.done [#allocation6], 16
        $region72: #{tpu_custom_call.1} parent=63 // pred_fallthru
          _
        // Predicated region
        $region73: #{tpu_custom_call.1} parent=63 // pred_check
          %p394 = pneg %p196
        $region74: #{tpu_custom_call.1} parent=63 // pred_check_branch
          %396 = sbr.rel (%p394) target = $region76
        $region75: #{tpu_custom_call.1} parent=63 // pred_region
          %397 = dma.done [#allocation6], 1024
        $region76: #{tpu_custom_call.1} parent=63 // pred_fallthru
          _
        // Predicated region
        $region77: #{tpu_custom_call.1} parent=63 // pred_check
          %p398 = pneg %p217
        $region78: #{tpu_custom_call.1} parent=63 // pred_check_branch
          %400 = sbr.rel (%p398) target = $region80
        $region79: #{tpu_custom_call.1} parent=63 // pred_region
          %401 = dma.done [#allocation9], 16
        $region80: #{tpu_custom_call.1} parent=63 // pred_fallthru
          _
        %s402 = smul.u32 16, %s28
        %p403 = scmp.lt.s32.totalorder %s402, 31
        %s404 = scalar_select %p403, %s402, 31
        %s405 = smul.addr %s404, 4
        %s406 = scalar_lea.vmem %s0, %s405
        %p407 = pneg %p49
        %p408 = pneg %p46
        %p409 = pneg %p70
        %p410 = pneg %p67
        %p411 = pneg %p91
        %p412 = pneg %p88
        %p413 = pneg %p112
        %p414 = pneg %p109
        %p415 = pneg %p133
        %p416 = pneg %p130
        %p417 = pneg %p154
        %p418 = pneg %p151
        %p419 = pneg %p175
        %p420 = pneg %p172
        %p421 = pneg %p196
        %p422 = pneg %p193
        %p423 = pneg %p217
        %p424 = pneg %p214
        %p425 = pneg %p238
        %p426 = pneg %p235
        %p427 = pneg %p259
        %p428 = pneg %p256
        %p429 = pneg %p285
        %p430 = pneg %p282
        %s431 = sand.u32 %s272, 1
        %s432 = scalar_lea.sflag [#allocation4], %s431
        %s433 = sand.u32 %s272, 1
        %s434 = smul.addr %s433, 128
        %s435 = scalar_lea.vmem [#allocation10], %s434
        %s436 = smul.u32 16, %s28
        %p437 = scmp.lt.s32.totalorder %s436, 31
        %s438 = scalar_select %p437, %s436, 31
        %s439 = smul.addr %s438, 4
        %s440 = scalar_lea.vmem %s0, %s439
        %s441 = smul.u32 16, %s28
        %s442 = smul.u32 16, %s28
        %v444 = vld [vmem:[%s440] sm:$0xf]
        %v445 = vld [vmem:[%s440 + $0x4] sm:$0xf]
        %v446 = vld [vmem:[%s440 + $0x8] sm:$0xf]
        %v447 = vld [vmem:[%s440 + $0xc] sm:$0xf]
        %v448 = vld [vmem:[%s440 + $0x10] sm:$0xf]
        %v449 = vld [vmem:[%s440 + $0x14] sm:$0xf]
        %v450 = vld [vmem:[%s440 + $0x18] sm:$0xf]
        %v451 = vld [vmem:[%s440 + $0x1c] sm:$0xf]
        %v452 = vld [vmem:[%s440 + $0x20] sm:$0xf]
        %v453 = vld [vmem:[%s440 + $0x24] sm:$0xf]
        %v454 = vld [vmem:[%s440 + $0x28] sm:$0xf]
        %v455 = vld [vmem:[%s440 + $0x2c] sm:$0xf]
        %v456 = vld [vmem:[%s440 + $0x30] sm:$0xf]
        %v457 = vld [vmem:[%s440 + $0x34] sm:$0xf]
        %v458 = vld [vmem:[%s440 + $0x38] sm:$0xf]
        %v459 = vld [vmem:[%s440 + $0x3c] sm:$0xf]
        %v460 = vld [vmem:[#allocation2] sm:$0xf]
        %v461 = vld [vmem:[#allocation2 + $0x4] sm:$0xf]
        %v462 = vld [vmem:[#allocation2 + $0x8] sm:$0xf]
        %v463 = vld [vmem:[#allocation2 + $0xc] sm:$0xf]
        %v464 = vld [vmem:[%s2] sm:$0x1]
        %v466 = vlaneseq
        %v467 = vshrl.u32 %v466, 7
        %v468 = vsub.s32 0, %v467
        %v469 = vrot.slane %v464, %v468
        %v487 = vunpack.c.l.b16 %v444
        %v488 = vunpack.c.l.b16 %v445
        %v489 = vunpack.c.l.b16 %v446
        %v490 = vunpack.c.l.b16 %v447
        %v491 = vunpack.c.l.b16 %v448
        %v492 = vunpack.c.l.b16 %v449
        %v493 = vunpack.c.l.b16 %v450
        %v494 = vunpack.c.l.b16 %v451
        %v495 = vunpack.c.l.b16 %v452
        %v496 = vunpack.c.l.b16 %v453
        %v497 = vunpack.c.l.b16 %v454
        %v498 = vunpack.c.l.b16 %v455
        %v499 = vunpack.c.l.b16 %v456
        %v500 = vunpack.c.l.b16 %v457
        %v501 = vunpack.c.l.b16 %v458
        %v502 = vunpack.c.l.b16 %v459
        %v503 = vpack.c.b16 %v488, %v487
        %v504 = vpack.c.b16 %v490, %v489
        %v505 = vpack.c.b16 %v492, %v491
        %v506 = vpack.c.b16 %v494, %v493
        %v507 = vpack.c.b16 %v496, %v495
        %v508 = vpack.c.b16 %v498, %v497
        %v509 = vpack.c.b16 %v500, %v499
        %v510 = vpack.c.b16 %v502, %v501
        %v515 = vunpack.c.l.b16 %v460
        %v516 = vunpack.c.l.b16 %v461
        %v517 = vunpack.c.l.b16 %v462
        %v518 = vunpack.c.l.b16 %v463
        %v519 = vpack.c.b16 %v516, %v515
        %v520 = vpack.c.b16 %v518, %v517
        %vm523 = vcmask 261120
        %v525 = vsel %vm523, %v503, 0
        %v528 = vsel %vm523, %v504, 0
        %v531 = vsel %vm523, %v505, 0
        %v534 = vsel %vm523, %v506, 0
        %v537 = vsel %vm523, %v507, 0
        %v540 = vsel %vm523, %v508, 0
        %v543 = vsel %vm523, %v509, 0
        %v546 = vsel %vm523, %v510, 0
        %548 = vmatprep.subr.bf16.mxu0 0
        %549 = vmatpush1.bf16.msra.mxu0 %v519
        %550 = vmatprep.subr.bf16.mxu0 0
        %551 = vmatpush1.bf16.msra.mxu0 %v520
        %552 = vmatprep.subr.bf16.mxu0 0
        %553 = vmatpush1.bf16.msra.mxu0 0
        %554 = vmatprep.subr.bf16.mxu0 0
        %555 = vmatpush1.bf16.msra.mxu0 0
        %556 = vmatprep.subr.bf16.mxu0 0
        %557 = vmatpush1.bf16.msra.mxu0 0
        %558 = vmatprep.subr.bf16.mxu0 0
        %559 = vmatpush1.bf16.msra.mxu0 0
        %560 = vmatprep.subr.bf16.mxu0 0
        %561 = vmatpush1.bf16.msra.mxu0 0
        %562 = vmatprep.subr.bf16.mxu0 0
        %563 = vmatpush1.bf16.msra.mxu0 0
        %564 = vmatprep.subr.bf16.mxu0 0
        %565 = vmatpush1.bf16.msra.mxu0 0
        %566 = vmatprep.subr.bf16.mxu0 0
        %567 = vmatpush1.bf16.msra.mxu0 0
        %568 = vmatprep.subr.bf16.mxu0 0
        %569 = vmatpush1.bf16.msra.mxu0 0
        %570 = vmatprep.subr.bf16.mxu0 0
        %571 = vmatpush1.bf16.msra.mxu0 0
        %572 = vmatprep.subr.bf16.mxu0 0
        %573 = vmatpush1.bf16.msra.mxu0 0
        %574 = vmatprep.subr.bf16.mxu0 0
        %575 = vmatpush1.bf16.msra.mxu0 0
        %576 = vmatprep.subr.bf16.mxu0 0
        %577 = vmatpush1.bf16.msra.mxu0 0
        %578 = vmatprep.subr.bf16.mxu0 0
        %579 = vmatpush1.bf16.msra.mxu0 0
        %580 = vmatprep.mubr.bf16.mxu0 0
        %581 = vmatmul.mubr.bf16.gmra.mrb[0].mxu0 %v525
        %v582 = vpop.f32.mrb[0].mxu0
        %v583 = vadd.f32 %v469, %v582
        %v584 = vpop.f32.mrb[0].mxu0
        %v585 = vpop.f32.mrb[0].mxu0
        %v586 = vadd.f32 %v469, %v585
        %v587 = vpop.f32.mrb[0].mxu0
        %588 = vmatprep.mubr.bf16.mxu0 0
        %589 = vmatmul.mubr.bf16.gmra.mrb[0].mxu0 %v528
        %v590 = vpop.f32.mrb[0].mxu0
        %v591 = vadd.f32 %v469, %v590
        %v592 = vpop.f32.mrb[0].mxu0
        %v593 = vpop.f32.mrb[0].mxu0
        %v594 = vadd.f32 %v469, %v593
        %v595 = vpop.f32.mrb[0].mxu0
        %596 = vmatprep.mubr.bf16.mxu0 0
        %597 = vmatmul.mubr.bf16.gmra.mrb[0].mxu0 %v531
        %v598 = vpop.f32.mrb[0].mxu0
        %v599 = vadd.f32 %v469, %v598
        %v600 = vpop.f32.mrb[0].mxu0
        %v601 = vpop.f32.mrb[0].mxu0
        %v602 = vadd.f32 %v469, %v601
        %v603 = vpop.f32.mrb[0].mxu0
        %604 = vmatprep.mubr.bf16.mxu0 0
        %605 = vmatmul.mubr.bf16.gmra.mrb[0].mxu0 %v534
        %v606 = vpop.f32.mrb[0].mxu0
        %v607 = vadd.f32 %v469, %v606
        %v608 = vpop.f32.mrb[0].mxu0
        %v609 = vpop.f32.mrb[0].mxu0
        %v610 = vadd.f32 %v469, %v609
        %v611 = vpop.f32.mrb[0].mxu0
        %612 = vmatprep.mubr.bf16.mxu0 0
        %613 = vmatmul.mubr.bf16.gmra.mrb[0].mxu0 %v537
        %v614 = vpop.f32.mrb[0].mxu0
        %v615 = vadd.f32 %v469, %v614
        %v616 = vpop.f32.mrb[0].mxu0
        %v617 = vpop.f32.mrb[0].mxu0
        %v618 = vadd.f32 %v469, %v617
        %v619 = vpop.f32.mrb[0].mxu0
        %620 = vmatprep.mubr.bf16.mxu0 0
        %621 = vmatmul.mubr.bf16.gmra.mrb[0].mxu0 %v540
        %v622 = vpop.f32.mrb[0].mxu0
        %v623 = vadd.f32 %v469, %v622
        %v624 = vpop.f32.mrb[0].mxu0
        %v625 = vpop.f32.mrb[0].mxu0
        %v626 = vadd.f32 %v469, %v625
        %v627 = vpop.f32.mrb[0].mxu0
        %628 = vmatprep.mubr.bf16.mxu0 0
        %629 = vmatmul.mubr.bf16.gmra.mrb[0].mxu0 %v543
        %v630 = vpop.f32.mrb[0].mxu0
        %v631 = vadd.f32 %v469, %v630
        %v632 = vpop.f32.mrb[0].mxu0
        %v633 = vpop.f32.mrb[0].mxu0
        %v634 = vadd.f32 %v469, %v633
        %v635 = vpop.f32.mrb[0].mxu0
        %636 = vmatprep.mubr.bf16.mxu0 0
        %637 = vmatmul.mubr.bf16.gmra.mrb[0].mxu0 %v546
        %v638 = vpop.f32.mrb[0].mxu0
        %v639 = vadd.f32 %v469, %v638
        %v640 = vpop.f32.mrb[0].mxu0
        %v641 = vpop.f32.mrb[0].mxu0
        %v642 = vadd.f32 %v469, %v641
        %v643 = vpop.f32.mrb[0].mxu0
        %644 = vdwg.mxu0
        %vm645 = vcmp.gt.f32.partialorder %v583, 0.0
        %vm646 = vcmp.gt.f32.partialorder %v586, 0.0
        %vm647 = vcmp.gt.f32.partialorder %v591, 0.0
        %vm648 = vcmp.gt.f32.partialorder %v594, 0.0
        %vm649 = vcmp.gt.f32.partialorder %v599, 0.0
        %vm650 = vcmp.gt.f32.partialorder %v602, 0.0
        %vm651 = vcmp.gt.f32.partialorder %v607, 0.0
        %vm652 = vcmp.gt.f32.partialorder %v610, 0.0
        %vm653 = vcmp.gt.f32.partialorder %v615, 0.0
        %vm654 = vcmp.gt.f32.partialorder %v618, 0.0
        %vm655 = vcmp.gt.f32.partialorder %v623, 0.0
        %vm656 = vcmp.gt.f32.partialorder %v626, 0.0
        %vm657 = vcmp.gt.f32.partialorder %v631, 0.0
        %vm658 = vcmp.gt.f32.partialorder %v634, 0.0
        %vm659 = vcmp.gt.f32.partialorder %v639, 0.0
        %vm660 = vcmp.gt.f32.partialorder %v642, 0.0
        %v661 = vmul.f32 %v583, 0.01
        %v662 = vmul.f32 %v586, 0.01
        %v663 = vmul.f32 %v591, 0.01
        %v664 = vmul.f32 %v594, 0.01
        %v665 = vmul.f32 %v599, 0.01
        %v666 = vmul.f32 %v602, 0.01
        %v667 = vmul.f32 %v607, 0.01
        %v668 = vmul.f32 %v610, 0.01
        %v669 = vmul.f32 %v615, 0.01
        %v670 = vmul.f32 %v618, 0.01
        %v671 = vmul.f32 %v623, 0.01
        %v672 = vmul.f32 %v626, 0.01
        %v673 = vmul.f32 %v631, 0.01
        %v674 = vmul.f32 %v634, 0.01
        %v675 = vmul.f32 %v639, 0.01
        %v676 = vmul.f32 %v642, 0.01
        %v677 = vsel %vm645, %v583, %v661
        %v678 = vsel %vm646, %v586, %v662
        %v679 = vsel %vm647, %v591, %v663
        %v680 = vsel %vm648, %v594, %v664
        %v681 = vsel %vm649, %v599, %v665
        %v682 = vsel %vm650, %v602, %v666
        %v683 = vsel %vm651, %v607, %v667
        %v684 = vsel %vm652, %v610, %v668
        %v685 = vsel %vm653, %v615, %v669
        %v686 = vsel %vm654, %v618, %v670
        %v687 = vsel %vm655, %v623, %v671
        %v688 = vsel %vm656, %v626, %v672
        %v689 = vsel %vm657, %v631, %v673
        %v690 = vsel %vm658, %v634, %v674
        %v691 = vsel %vm659, %v639, %v675
        %v692 = vsel %vm660, %v642, %v676
        %v693 = vpack.c.bf16 %v678, %v677
        %v694 = vpack.c.bf16 %v680, %v679
        %v695 = vpack.c.bf16 %v682, %v681
        %v696 = vpack.c.bf16 %v684, %v683
        %v697 = vpack.c.bf16 %v686, %v685
        %v698 = vpack.c.bf16 %v688, %v687
        %v699 = vpack.c.bf16 %v690, %v689
        %v700 = vpack.c.bf16 %v692, %v691
        %v701 = vld [vmem:[%s3] sm:$0xf]
        %v702 = vld [vmem:[%s3 + $0x4] sm:$0xf]
        %v703 = vld [vmem:[%s3 + $0x8] sm:$0xf]
        %v704 = vld [vmem:[%s3 + $0xc] sm:$0xf]
        %v705 = vld [vmem:[%s3 + $0x10] sm:$0xf]
        %v706 = vld [vmem:[%s3 + $0x14] sm:$0xf]
        %v707 = vld [vmem:[%s3 + $0x18] sm:$0xf]
        %v708 = vld [vmem:[%s3 + $0x1c] sm:$0xf]
        %v709 = vld [vmem:[%s3 + $0x20] sm:$0xf]
        %v710 = vld [vmem:[%s3 + $0x24] sm:$0xf]
        %v711 = vld [vmem:[%s3 + $0x28] sm:$0xf]
        %v712 = vld [vmem:[%s3 + $0x2c] sm:$0xf]
        %v713 = vld [vmem:[%s3 + $0x30] sm:$0xf]
        %v714 = vld [vmem:[%s3 + $0x34] sm:$0xf]
        %v715 = vld [vmem:[%s3 + $0x38] sm:$0xf]
        %v716 = vld [vmem:[%s3 + $0x3c] sm:$0xf]
        %v717 = vld [vmem:[%s4] sm:$0x1]
        %v719 = vlaneseq
        %v720 = vshrl.u32 %v719, 7
        %v721 = vsub.s32 0, %v720
        %v722 = vrot.slane %v717, %v721
        %v740 = vunpack.c.l.b16 %v701
        %v741 = vunpack.c.l.b16 %v702
        %v742 = vunpack.c.l.b16 %v703
        %v743 = vunpack.c.l.b16 %v704
        %v744 = vunpack.c.l.b16 %v705
        %v745 = vunpack.c.l.b16 %v706
        %v746 = vunpack.c.l.b16 %v707
        %v747 = vunpack.c.l.b16 %v708
        %v748 = vunpack.c.l.b16 %v709
        %v749 = vunpack.c.l.b16 %v710
        %v750 = vunpack.c.l.b16 %v711
        %v751 = vunpack.c.l.b16 %v712
        %v752 = vunpack.c.l.b16 %v713
        %v753 = vunpack.c.l.b16 %v714
        %v754 = vunpack.c.l.b16 %v715
        %v755 = vunpack.c.l.b16 %v716
        %v756 = vpack.c.b16 %v741, %v740
        %v757 = vpack.c.b16 %v743, %v742
        %v758 = vpack.c.b16 %v745, %v744
        %v759 = vpack.c.b16 %v747, %v746
        %v760 = vpack.c.b16 %v749, %v748
        %v761 = vpack.c.b16 %v751, %v750
        %v762 = vpack.c.b16 %v753, %v752
        %v763 = vpack.c.b16 %v755, %v754
        %772 = vmatprep.subr.bf16.mxu0 0
        %773 = vmatpush1.bf16.msra.mxu0 %v756
        %774 = vmatprep.subr.bf16.mxu0 0
        %775 = vmatpush1.bf16.msra.mxu0 %v757
        %776 = vmatprep.subr.bf16.mxu0 0
        %777 = vmatpush1.bf16.msra.mxu0 %v758
        %778 = vmatprep.subr.bf16.mxu0 0
        %779 = vmatpush1.bf16.msra.mxu0 %v759
        %780 = vmatprep.subr.bf16.mxu0 0
        %781 = vmatpush1.bf16.msra.mxu0 %v760
        %782 = vmatprep.subr.bf16.mxu0 0
        %783 = vmatpush1.bf16.msra.mxu0 %v761
        %784 = vmatprep.subr.bf16.mxu0 0
        %785 = vmatpush1.bf16.msra.mxu0 %v762
        %786 = vmatprep.subr.bf16.mxu0 0
        %787 = vmatpush1.bf16.msra.mxu0 %v763
        %788 = vmatprep.subr.bf16.mxu0 0
        %789 = vmatpush1.bf16.msra.mxu0 0
        %790 = vmatprep.subr.bf16.mxu0 0
        %791 = vmatpush1.bf16.msra.mxu0 0
        %792 = vmatprep.subr.bf16.mxu0 0
        %793 = vmatpush1.bf16.msra.mxu0 0
        %794 = vmatprep.subr.bf16.mxu0 0
        %795 = vmatpush1.bf16.msra.mxu0 0
        %796 = vmatprep.subr.bf16.mxu0 0
        %797 = vmatpush1.bf16.msra.mxu0 0
        %798 = vmatprep.subr.bf16.mxu0 0
        %799 = vmatpush1.bf16.msra.mxu0 0
        %800 = vmatprep.subr.bf16.mxu0 0
        %801 = vmatpush1.bf16.msra.mxu0 0
        %802 = vmatprep.subr.bf16.mxu0 0
        %803 = vmatpush1.bf16.msra.mxu0 0
        %804 = vmatprep.mubr.bf16.mxu0 0
        %805 = vmatmul.mubr.bf16.gmra.mrb[0].mxu0 %v693
        %v806 = vpop.f32.mrb[0].mxu0
        %v807 = vadd.f32 %v722, %v806
        %v808 = vpop.f32.mrb[0].mxu0
        %v809 = vpop.f32.mrb[0].mxu0
        %v810 = vadd.f32 %v722, %v809
        %v811 = vpop.f32.mrb[0].mxu0
        %812 = vmatprep.mubr.bf16.mxu0 0
        %813 = vmatmul.mubr.bf16.gmra.mrb[0].mxu0 %v694
        %v814 = vpop.f32.mrb[0].mxu0
        %v815 = vadd.f32 %v722, %v814
        %v816 = vpop.f32.mrb[0].mxu0
        %v817 = vpop.f32.mrb[0].mxu0
        %v818 = vadd.f32 %v722, %v817
        %v819 = vpop.f32.mrb[0].mxu0
        %820 = vmatprep.mubr.bf16.mxu0 0
        %821 = vmatmul.mubr.bf16.gmra.mrb[0].mxu0 %v695
        %v822 = vpop.f32.mrb[0].mxu0
        %v823 = vadd.f32 %v722, %v822
        %v824 = vpop.f32.mrb[0].mxu0
        %v825 = vpop.f32.mrb[0].mxu0
        %v826 = vadd.f32 %v722, %v825
        %v827 = vpop.f32.mrb[0].mxu0
        %828 = vmatprep.mubr.bf16.mxu0 0
        %829 = vmatmul.mubr.bf16.gmra.mrb[0].mxu0 %v696
        %v830 = vpop.f32.mrb[0].mxu0
        %v831 = vadd.f32 %v722, %v830
        %v832 = vpop.f32.mrb[0].mxu0
        %v833 = vpop.f32.mrb[0].mxu0
        %v834 = vadd.f32 %v722, %v833
        %v835 = vpop.f32.mrb[0].mxu0
        %836 = vmatprep.mubr.bf16.mxu0 0
        %837 = vmatmul.mubr.bf16.gmra.mrb[0].mxu0 %v697
        %v838 = vpop.f32.mrb[0].mxu0
        %v839 = vadd.f32 %v722, %v838
        %v840 = vpop.f32.mrb[0].mxu0
        %v841 = vpop.f32.mrb[0].mxu0
        %v842 = vadd.f32 %v722, %v841
        %v843 = vpop.f32.mrb[0].mxu0
        %844 = vmatprep.mubr.bf16.mxu0 0
        %845 = vmatmul.mubr.bf16.gmra.mrb[0].mxu0 %v698
        %v846 = vpop.f32.mrb[0].mxu0
        %v847 = vadd.f32 %v722, %v846
        %v848 = vpop.f32.mrb[0].mxu0
        %v849 = vpop.f32.mrb[0].mxu0
        %v850 = vadd.f32 %v722, %v849
        %v851 = vpop.f32.mrb[0].mxu0
        %852 = vmatprep.mubr.bf16.mxu0 0
        %853 = vmatmul.mubr.bf16.gmra.mrb[0].mxu0 %v699
        %v854 = vpop.f32.mrb[0].mxu0
        %v855 = vadd.f32 %v722, %v854
        %v856 = vpop.f32.mrb[0].mxu0
        %v857 = vpop.f32.mrb[0].mxu0
        %v858 = vadd.f32 %v722, %v857
        %v859 = vpop.f32.mrb[0].mxu0
        %860 = vmatprep.mubr.bf16.mxu0 0
        %861 = vmatmul.mubr.bf16.gmra.mrb[0].mxu0 %v700
        %v862 = vpop.f32.mrb[0].mxu0
        %v863 = vadd.f32 %v722, %v862
        %v864 = vpop.f32.mrb[0].mxu0
        %v865 = vpop.f32.mrb[0].mxu0
        %v866 = vadd.f32 %v722, %v865
        %v867 = vpop.f32.mrb[0].mxu0
        %868 = vdwg.mxu0
        %vm869 = vcmp.gt.f32.partialorder %v807, 0.0
        %vm870 = vcmp.gt.f32.partialorder %v810, 0.0
        %vm871 = vcmp.gt.f32.partialorder %v815, 0.0
        %vm872 = vcmp.gt.f32.partialorder %v818, 0.0
        %vm873 = vcmp.gt.f32.partialorder %v823, 0.0
        %vm874 = vcmp.gt.f32.partialorder %v826, 0.0
        %vm875 = vcmp.gt.f32.partialorder %v831, 0.0
        %vm876 = vcmp.gt.f32.partialorder %v834, 0.0
        %vm877 = vcmp.gt.f32.partialorder %v839, 0.0
        %vm878 = vcmp.gt.f32.partialorder %v842, 0.0
        %vm879 = vcmp.gt.f32.partialorder %v847, 0.0
        %vm880 = vcmp.gt.f32.partialorder %v850, 0.0
        %vm881 = vcmp.gt.f32.partialorder %v855, 0.0
        %vm882 = vcmp.gt.f32.partialorder %v858, 0.0
        %vm883 = vcmp.gt.f32.partialorder %v863, 0.0
        %vm884 = vcmp.gt.f32.partialorder %v866, 0.0
        %v885 = vmul.f32 %v807, 0.01
        %v886 = vmul.f32 %v810, 0.01
        %v887 = vmul.f32 %v815, 0.01
        %v888 = vmul.f32 %v818, 0.01
        %v889 = vmul.f32 %v823, 0.01
        %v890 = vmul.f32 %v826, 0.01
        %v891 = vmul.f32 %v831, 0.01
        %v892 = vmul.f32 %v834, 0.01
        %v893 = vmul.f32 %v839, 0.01
        %v894 = vmul.f32 %v842, 0.01
        %v895 = vmul.f32 %v847, 0.01
        %v896 = vmul.f32 %v850, 0.01
        %v897 = vmul.f32 %v855, 0.01
        %v898 = vmul.f32 %v858, 0.01
        %v899 = vmul.f32 %v863, 0.01
        %v900 = vmul.f32 %v866, 0.01
        %v901 = vsel %vm869, %v807, %v885
        %v902 = vsel %vm870, %v810, %v886
        %v903 = vsel %vm871, %v815, %v887
        %v904 = vsel %vm872, %v818, %v888
        %v905 = vsel %vm873, %v823, %v889
        %v906 = vsel %vm874, %v826, %v890
        %v907 = vsel %vm875, %v831, %v891
        %v908 = vsel %vm876, %v834, %v892
        %v909 = vsel %vm877, %v839, %v893
        %v910 = vsel %vm878, %v842, %v894
        %v911 = vsel %vm879, %v847, %v895
        %v912 = vsel %vm880, %v850, %v896
        %v913 = vsel %vm881, %v855, %v897
        %v914 = vsel %vm882, %v858, %v898
        %v915 = vsel %vm883, %v863, %v899
        %v916 = vsel %vm884, %v866, %v900
        %v917 = vpack.c.bf16 %v902, %v901
        %v918 = vpack.c.bf16 %v904, %v903
        %v919 = vpack.c.bf16 %v906, %v905
        %v920 = vpack.c.bf16 %v908, %v907
        %v921 = vpack.c.bf16 %v910, %v909
        %v922 = vpack.c.bf16 %v912, %v911
        %v923 = vpack.c.bf16 %v914, %v913
        %v924 = vpack.c.bf16 %v916, %v915
        %v925 = vld [vmem:[%s5] sm:$0xf]
        %v926 = vld [vmem:[%s5 + $0x4] sm:$0xf]
        %v927 = vld [vmem:[%s5 + $0x8] sm:$0xf]
        %v928 = vld [vmem:[%s5 + $0xc] sm:$0xf]
        %v929 = vld [vmem:[%s5 + $0x10] sm:$0xf]
        %v930 = vld [vmem:[%s5 + $0x14] sm:$0xf]
        %v931 = vld [vmem:[%s5 + $0x18] sm:$0xf]
        %v932 = vld [vmem:[%s5 + $0x1c] sm:$0xf]
        %v933 = vld [vmem:[%s5 + $0x20] sm:$0xf]
        %v934 = vld [vmem:[%s5 + $0x24] sm:$0xf]
        %v935 = vld [vmem:[%s5 + $0x28] sm:$0xf]
        %v936 = vld [vmem:[%s5 + $0x2c] sm:$0xf]
        %v937 = vld [vmem:[%s5 + $0x30] sm:$0xf]
        %v938 = vld [vmem:[%s5 + $0x34] sm:$0xf]
        %v939 = vld [vmem:[%s5 + $0x38] sm:$0xf]
        %v940 = vld [vmem:[%s5 + $0x3c] sm:$0xf]
        %v941 = vld [vmem:[#allocation5] sm:$0x1]
        %v943 = vlaneseq
        %v944 = vshrl.u32 %v943, 7
        %v945 = vsub.s32 0, %v944
        %v946 = vrot.slane %v941, %v945
        %v964 = vunpack.c.l.b16 %v925
        %v965 = vunpack.c.l.b16 %v926
        %v966 = vunpack.c.l.b16 %v927
        %v967 = vunpack.c.l.b16 %v928
        %v968 = vunpack.c.l.b16 %v929
        %v969 = vunpack.c.l.b16 %v930
        %v970 = vunpack.c.l.b16 %v931
        %v971 = vunpack.c.l.b16 %v932
        %v972 = vunpack.c.l.b16 %v933
        %v973 = vunpack.c.l.b16 %v934
        %v974 = vunpack.c.l.b16 %v935
        %v975 = vunpack.c.l.b16 %v936
        %v976 = vunpack.c.l.b16 %v937
        %v977 = vunpack.c.l.b16 %v938
        %v978 = vunpack.c.l.b16 %v939
        %v979 = vunpack.c.l.b16 %v940
        %v980 = vpack.c.b16 %v965, %v964
        %v981 = vpack.c.b16 %v967, %v966
        %v982 = vpack.c.b16 %v969, %v968
        %v983 = vpack.c.b16 %v971, %v970
        %v984 = vpack.c.b16 %v973, %v972
        %v985 = vpack.c.b16 %v975, %v974
        %v986 = vpack.c.b16 %v977, %v976
        %v987 = vpack.c.b16 %v979, %v978
        %996 = vmatprep.subr.bf16.mxu0 0
        %997 = vmatpush1.bf16.msra.mxu0 %v980
        %998 = vmatprep.subr.bf16.mxu0 0
        %999 = vmatpush1.bf16.msra.mxu0 %v981
        %1000 = vmatprep.subr.bf16.mxu0 0
        %1001 = vmatpush1.bf16.msra.mxu0 %v982
        %1002 = vmatprep.subr.bf16.mxu0 0
        %1003 = vmatpush1.bf16.msra.mxu0 %v983
        %1004 = vmatprep.subr.bf16.mxu0 0
        %1005 = vmatpush1.bf16.msra.mxu0 %v984
        %1006 = vmatprep.subr.bf16.mxu0 0
        %1007 = vmatpush1.bf16.msra.mxu0 %v985
        %1008 = vmatprep.subr.bf16.mxu0 0
        %1009 = vmatpush1.bf16.msra.mxu0 %v986
        %1010 = vmatprep.subr.bf16.mxu0 0
        %1011 = vmatpush1.bf16.msra.mxu0 %v987
        %1012 = vmatprep.subr.bf16.mxu0 0
        %1013 = vmatpush1.bf16.msra.mxu0 0
        %1014 = vmatprep.subr.bf16.mxu0 0
        %1015 = vmatpush1.bf16.msra.mxu0 0
        %1016 = vmatprep.subr.bf16.mxu0 0
        %1017 = vmatpush1.bf16.msra.mxu0 0
        %1018 = vmatprep.subr.bf16.mxu0 0
        %1019 = vmatpush1.bf16.msra.mxu0 0
        %1020 = vmatprep.subr.bf16.mxu0 0
        %1021 = vmatpush1.bf16.msra.mxu0 0
        %1022 = vmatprep.subr.bf16.mxu0 0
        %1023 = vmatpush1.bf16.msra.mxu0 0
        %1024 = vmatprep.subr.bf16.mxu0 0
        %1025 = vmatpush1.bf16.msra.mxu0 0
        %1026 = vmatprep.subr.bf16.mxu0 0
        %1027 = vmatpush1.bf16.msra.mxu0 0
        %1028 = vmatprep.mubr.bf16.mxu0 0
        %1029 = vmatmul.mubr.bf16.gmra.mrb[0].mxu0 %v917
        %v1030 = vpop.f32.mrb[0].mxu0
        %v1031 = vadd.f32 %v946, %v1030
        %v1032 = vpop.f32.mrb[0].mxu0
        %v1033 = vpop.f32.mrb[0].mxu0
        %v1034 = vadd.f32 %v946, %v1033
        %v1035 = vpop.f32.mrb[0].mxu0
        %1036 = vmatprep.mubr.bf16.mxu0 0
        %1037 = vmatmul.mubr.bf16.gmra.mrb[0].mxu0 %v918
        %v1038 = vpop.f32.mrb[0].mxu0
        %v1039 = vadd.f32 %v946, %v1038
        %v1040 = vpop.f32.mrb[0].mxu0
        %v1041 = vpop.f32.mrb[0].mxu0
        %v1042 = vadd.f32 %v946, %v1041
        %v1043 = vpop.f32.mrb[0].mxu0
        %1044 = vmatprep.mubr.bf16.mxu0 0
        %1045 = vmatmul.mubr.bf16.gmra.mrb[0].mxu0 %v919
        %v1046 = vpop.f32.mrb[0].mxu0
        %v1047 = vadd.f32 %v946, %v1046
        %v1048 = vpop.f32.mrb[0].mxu0
        %v1049 = vpop.f32.mrb[0].mxu0
        %v1050 = vadd.f32 %v946, %v1049
        %v1051 = vpop.f32.mrb[0].mxu0
        %1052 = vmatprep.mubr.bf16.mxu0 0
        %1053 = vmatmul.mubr.bf16.gmra.mrb[0].mxu0 %v920
        %v1054 = vpop.f32.mrb[0].mxu0
        %v1055 = vadd.f32 %v946, %v1054
        %v1056 = vpop.f32.mrb[0].mxu0
        %v1057 = vpop.f32.mrb[0].mxu0
        %v1058 = vadd.f32 %v946, %v1057
        %v1059 = vpop.f32.mrb[0].mxu0
        %1060 = vmatprep.mubr.bf16.mxu0 0
        %1061 = vmatmul.mubr.bf16.gmra.mrb[0].mxu0 %v921
        %v1062 = vpop.f32.mrb[0].mxu0
        %v1063 = vadd.f32 %v946, %v1062
        %v1064 = vpop.f32.mrb[0].mxu0
        %v1065 = vpop.f32.mrb[0].mxu0
        %v1066 = vadd.f32 %v946, %v1065
        %v1067 = vpop.f32.mrb[0].mxu0
        %1068 = vmatprep.mubr.bf16.mxu0 0
        %1069 = vmatmul.mubr.bf16.gmra.mrb[0].mxu0 %v922
        %v1070 = vpop.f32.mrb[0].mxu0
        %v1071 = vadd.f32 %v946, %v1070
        %v1072 = vpop.f32.mrb[0].mxu0
        %v1073 = vpop.f32.mrb[0].mxu0
        %v1074 = vadd.f32 %v946, %v1073
        %v1075 = vpop.f32.mrb[0].mxu0
        %1076 = vmatprep.mubr.bf16.mxu0 0
        %1077 = vmatmul.mubr.bf16.gmra.mrb[0].mxu0 %v923
        %v1078 = vpop.f32.mrb[0].mxu0
        %v1079 = vadd.f32 %v946, %v1078
        %v1080 = vpop.f32.mrb[0].mxu0
        %v1081 = vpop.f32.mrb[0].mxu0
        %v1082 = vadd.f32 %v946, %v1081
        %v1083 = vpop.f32.mrb[0].mxu0
        %1084 = vmatprep.mubr.bf16.mxu0 0
        %1085 = vmatmul.mubr.bf16.gmra.mrb[0].mxu0 %v924
        %v1086 = vpop.f32.mrb[0].mxu0
        %v1087 = vadd.f32 %v946, %v1086
        %v1088 = vpop.f32.mrb[0].mxu0
        %v1089 = vpop.f32.mrb[0].mxu0
        %v1090 = vadd.f32 %v946, %v1089
        %v1091 = vpop.f32.mrb[0].mxu0
        %1092 = vdwg.mxu0
        %vm1093 = vcmp.gt.f32.partialorder %v1031, 0.0
        %vm1094 = vcmp.gt.f32.partialorder %v1034, 0.0
        %vm1095 = vcmp.gt.f32.partialorder %v1039, 0.0
        %vm1096 = vcmp.gt.f32.partialorder %v1042, 0.0
        %vm1097 = vcmp.gt.f32.partialorder %v1047, 0.0
        %vm1098 = vcmp.gt.f32.partialorder %v1050, 0.0
        %vm1099 = vcmp.gt.f32.partialorder %v1055, 0.0
        %vm1100 = vcmp.gt.f32.partialorder %v1058, 0.0
        %vm1101 = vcmp.gt.f32.partialorder %v1063, 0.0
        %vm1102 = vcmp.gt.f32.partialorder %v1066, 0.0
        %vm1103 = vcmp.gt.f32.partialorder %v1071, 0.0
        %vm1104 = vcmp.gt.f32.partialorder %v1074, 0.0
        %vm1105 = vcmp.gt.f32.partialorder %v1079, 0.0
        %vm1106 = vcmp.gt.f32.partialorder %v1082, 0.0
        %vm1107 = vcmp.gt.f32.partialorder %v1087, 0.0
        %vm1108 = vcmp.gt.f32.partialorder %v1090, 0.0
        %v1109 = vmul.f32 %v1031, 0.01
        %v1110 = vmul.f32 %v1034, 0.01
        %v1111 = vmul.f32 %v1039, 0.01
        %v1112 = vmul.f32 %v1042, 0.01
        %v1113 = vmul.f32 %v1047, 0.01
        %v1114 = vmul.f32 %v1050, 0.01
        %v1115 = vmul.f32 %v1055, 0.01
        %v1116 = vmul.f32 %v1058, 0.01
        %v1117 = vmul.f32 %v1063, 0.01
        %v1118 = vmul.f32 %v1066, 0.01
        %v1119 = vmul.f32 %v1071, 0.01
        %v1120 = vmul.f32 %v1074, 0.01
        %v1121 = vmul.f32 %v1079, 0.01
        %v1122 = vmul.f32 %v1082, 0.01
        %v1123 = vmul.f32 %v1087, 0.01
        %v1124 = vmul.f32 %v1090, 0.01
        %v1125 = vsel %vm1093, %v1031, %v1109
        %v1126 = vsel %vm1094, %v1034, %v1110
        %v1127 = vsel %vm1095, %v1039, %v1111
        %v1128 = vsel %vm1096, %v1042, %v1112
        %v1129 = vsel %vm1097, %v1047, %v1113
        %v1130 = vsel %vm1098, %v1050, %v1114
        %v1131 = vsel %vm1099, %v1055, %v1115
        %v1132 = vsel %vm1100, %v1058, %v1116
        %v1133 = vsel %vm1101, %v1063, %v1117
        %v1134 = vsel %vm1102, %v1066, %v1118
        %v1135 = vsel %vm1103, %v1071, %v1119
        %v1136 = vsel %vm1104, %v1074, %v1120
        %v1137 = vsel %vm1105, %v1079, %v1121
        %v1138 = vsel %vm1106, %v1082, %v1122
        %v1139 = vsel %vm1107, %v1087, %v1123
        %v1140 = vsel %vm1108, %v1090, %v1124
        %v1141 = vpack.c.bf16 %v1126, %v1125
        %v1142 = vpack.c.bf16 %v1128, %v1127
        %v1143 = vpack.c.bf16 %v1130, %v1129
        %v1144 = vpack.c.bf16 %v1132, %v1131
        %v1145 = vpack.c.bf16 %v1134, %v1133
        %v1146 = vpack.c.bf16 %v1136, %v1135
        %v1147 = vpack.c.bf16 %v1138, %v1137
        %v1148 = vpack.c.bf16 %v1140, %v1139
        %v1149 = vld [vmem:[#allocation7] sm:$0xf]
        %v1150 = vld [vmem:[#allocation7 + $0x4] sm:$0xf]
        %v1151 = vld [vmem:[#allocation7 + $0x8] sm:$0xf]
        %v1152 = vld [vmem:[#allocation7 + $0xc] sm:$0xf]
        %v1153 = vld [vmem:[#allocation7 + $0x10] sm:$0xf]
        %v1154 = vld [vmem:[#allocation7 + $0x14] sm:$0xf]
        %v1155 = vld [vmem:[#allocation7 + $0x18] sm:$0xf]
        %v1156 = vld [vmem:[#allocation7 + $0x1c] sm:$0xf]
        %v1157 = vld [vmem:[#allocation7 + $0x20] sm:$0xf]
        %v1158 = vld [vmem:[#allocation7 + $0x24] sm:$0xf]
        %v1159 = vld [vmem:[#allocation7 + $0x28] sm:$0xf]
        %v1160 = vld [vmem:[#allocation7 + $0x2c] sm:$0xf]
        %v1161 = vld [vmem:[#allocation7 + $0x30] sm:$0xf]
        %v1162 = vld [vmem:[#allocation7 + $0x34] sm:$0xf]
        %v1163 = vld [vmem:[#allocation7 + $0x38] sm:$0xf]
        %v1164 = vld [vmem:[#allocation7 + $0x3c] sm:$0xf]
        %v1165 = vld [vmem:[#allocation8] sm:$0x1]
        %v1167 = vlaneseq
        %v1168 = vshrl.u32 %v1167, 7
        %v1169 = vsub.s32 0, %v1168
        %v1170 = vrot.slane %v1165, %v1169
        %v1188 = vunpack.c.l.b16 %v1149
        %v1189 = vunpack.c.l.b16 %v1150
        %v1190 = vunpack.c.l.b16 %v1151
        %v1191 = vunpack.c.l.b16 %v1152
        %v1192 = vunpack.c.l.b16 %v1153
        %v1193 = vunpack.c.l.b16 %v1154
        %v1194 = vunpack.c.l.b16 %v1155
        %v1195 = vunpack.c.l.b16 %v1156
        %v1196 = vunpack.c.l.b16 %v1157
        %v1197 = vunpack.c.l.b16 %v1158
        %v1198 = vunpack.c.l.b16 %v1159
        %v1199 = vunpack.c.l.b16 %v1160
        %v1200 = vunpack.c.l.b16 %v1161
        %v1201 = vunpack.c.l.b16 %v1162
        %v1202 = vunpack.c.l.b16 %v1163
        %v1203 = vunpack.c.l.b16 %v1164
        %v1204 = vpack.c.b16 %v1189, %v1188
        %v1205 = vpack.c.b16 %v1191, %v1190
        %v1206 = vpack.c.b16 %v1193, %v1192
        %v1207 = vpack.c.b16 %v1195, %v1194
        %v1208 = vpack.c.b16 %v1197, %v1196
        %v1209 = vpack.c.b16 %v1199, %v1198
        %v1210 = vpack.c.b16 %v1201, %v1200
        %v1211 = vpack.c.b16 %v1203, %v1202
        %1220 = vmatprep.subr.bf16.mxu0 0
        %1221 = vmatpush1.bf16.msra.mxu0 %v1204
        %1222 = vmatprep.subr.bf16.mxu0 0
        %1223 = vmatpush1.bf16.msra.mxu0 %v1205
        %1224 = vmatprep.subr.bf16.mxu0 0
        %1225 = vmatpush1.bf16.msra.mxu0 %v1206
        %1226 = vmatprep.subr.bf16.mxu0 0
        %1227 = vmatpush1.bf16.msra.mxu0 %v1207
        %1228 = vmatprep.subr.bf16.mxu0 0
        %1229 = vmatpush1.bf16.msra.mxu0 %v1208
        %1230 = vmatprep.subr.bf16.mxu0 0
        %1231 = vmatpush1.bf16.msra.mxu0 %v1209
        %1232 = vmatprep.subr.bf16.mxu0 0
        %1233 = vmatpush1.bf16.msra.mxu0 %v1210
        %1234 = vmatprep.subr.bf16.mxu0 0
        %1235 = vmatpush1.bf16.msra.mxu0 %v1211
        %1236 = vmatprep.subr.bf16.mxu0 0
        %1237 = vmatpush1.bf16.msra.mxu0 0
        %1238 = vmatprep.subr.bf16.mxu0 0
        %1239 = vmatpush1.bf16.msra.mxu0 0
        %1240 = vmatprep.subr.bf16.mxu0 0
        %1241 = vmatpush1.bf16.msra.mxu0 0
        %1242 = vmatprep.subr.bf16.mxu0 0
        %1243 = vmatpush1.bf16.msra.mxu0 0
        %1244 = vmatprep.subr.bf16.mxu0 0
        %1245 = vmatpush1.bf16.msra.mxu0 0
        %1246 = vmatprep.subr.bf16.mxu0 0
        %1247 = vmatpush1.bf16.msra.mxu0 0
        %1248 = vmatprep.subr.bf16.mxu0 0
        %1249 = vmatpush1.bf16.msra.mxu0 0
        %1250 = vmatprep.subr.bf16.mxu0 0
        %1251 = vmatpush1.bf16.msra.mxu0 0
        %1252 = vmatprep.mubr.bf16.mxu0 0
        %1253 = vmatmul.mubr.bf16.gmra.mrb[0].mxu0 %v1141
        %v1254 = vpop.f32.mrb[0].mxu0
        %v1255 = vadd.f32 %v1170, %v1254
        %v1256 = vpop.f32.mrb[0].mxu0
        %v1257 = vpop.f32.mrb[0].mxu0
        %v1258 = vadd.f32 %v1170, %v1257
        %v1259 = vpop.f32.mrb[0].mxu0
        %1260 = vmatprep.mubr.bf16.mxu0 0
        %1261 = vmatmul.mubr.bf16.gmra.mrb[0].mxu0 %v1142
        %v1262 = vpop.f32.mrb[0].mxu0
        %v1263 = vadd.f32 %v1170, %v1262
        %v1264 = vpop.f32.mrb[0].mxu0
        %v1265 = vpop.f32.mrb[0].mxu0
        %v1266 = vadd.f32 %v1170, %v1265
        %v1267 = vpop.f32.mrb[0].mxu0
        %1268 = vmatprep.mubr.bf16.mxu0 0
        %1269 = vmatmul.mubr.bf16.gmra.mrb[0].mxu0 %v1143
        %v1270 = vpop.f32.mrb[0].mxu0
        %v1271 = vadd.f32 %v1170, %v1270
        %v1272 = vpop.f32.mrb[0].mxu0
        %v1273 = vpop.f32.mrb[0].mxu0
        %v1274 = vadd.f32 %v1170, %v1273
        %v1275 = vpop.f32.mrb[0].mxu0
        %1276 = vmatprep.mubr.bf16.mxu0 0
        %1277 = vmatmul.mubr.bf16.gmra.mrb[0].mxu0 %v1144
        %v1278 = vpop.f32.mrb[0].mxu0
        %v1279 = vadd.f32 %v1170, %v1278
        %v1280 = vpop.f32.mrb[0].mxu0
        %v1281 = vpop.f32.mrb[0].mxu0
        %v1282 = vadd.f32 %v1170, %v1281
        %v1283 = vpop.f32.mrb[0].mxu0
        %1284 = vmatprep.mubr.bf16.mxu0 0
        %1285 = vmatmul.mubr.bf16.gmra.mrb[0].mxu0 %v1145
        %v1286 = vpop.f32.mrb[0].mxu0
        %v1287 = vadd.f32 %v1170, %v1286
        %v1288 = vpop.f32.mrb[0].mxu0
        %v1289 = vpop.f32.mrb[0].mxu0
        %v1290 = vadd.f32 %v1170, %v1289
        %v1291 = vpop.f32.mrb[0].mxu0
        %1292 = vmatprep.mubr.bf16.mxu0 0
        %1293 = vmatmul.mubr.bf16.gmra.mrb[0].mxu0 %v1146
        %v1294 = vpop.f32.mrb[0].mxu0
        %v1295 = vadd.f32 %v1170, %v1294
        %v1296 = vpop.f32.mrb[0].mxu0
        %v1297 = vpop.f32.mrb[0].mxu0
        %v1298 = vadd.f32 %v1170, %v1297
        %v1299 = vpop.f32.mrb[0].mxu0
        %1300 = vmatprep.mubr.bf16.mxu0 0
        %1301 = vmatmul.mubr.bf16.gmra.mrb[0].mxu0 %v1147
        %v1302 = vpop.f32.mrb[0].mxu0
        %v1303 = vadd.f32 %v1170, %v1302
        %v1304 = vpop.f32.mrb[0].mxu0
        %v1305 = vpop.f32.mrb[0].mxu0
        %v1306 = vadd.f32 %v1170, %v1305
        %v1307 = vpop.f32.mrb[0].mxu0
        %1308 = vmatprep.mubr.bf16.mxu0 0
        %1309 = vmatmul.mubr.bf16.gmra.mrb[0].mxu0 %v1148
        %v1310 = vpop.f32.mrb[0].mxu0
        %v1311 = vadd.f32 %v1170, %v1310
        %v1312 = vpop.f32.mrb[0].mxu0
        %v1313 = vpop.f32.mrb[0].mxu0
        %v1314 = vadd.f32 %v1170, %v1313
        %v1315 = vpop.f32.mrb[0].mxu0
        %1316 = vdwg.mxu0
        %vm1317 = vcmp.gt.f32.partialorder %v1255, 0.0
        %vm1318 = vcmp.gt.f32.partialorder %v1258, 0.0
        %vm1319 = vcmp.gt.f32.partialorder %v1263, 0.0
        %vm1320 = vcmp.gt.f32.partialorder %v1266, 0.0
        %vm1321 = vcmp.gt.f32.partialorder %v1271, 0.0
        %vm1322 = vcmp.gt.f32.partialorder %v1274, 0.0
        %vm1323 = vcmp.gt.f32.partialorder %v1279, 0.0
        %vm1324 = vcmp.gt.f32.partialorder %v1282, 0.0
        %vm1325 = vcmp.gt.f32.partialorder %v1287, 0.0
        %vm1326 = vcmp.gt.f32.partialorder %v1290, 0.0
        %vm1327 = vcmp.gt.f32.partialorder %v1295, 0.0
        %vm1328 = vcmp.gt.f32.partialorder %v1298, 0.0
        %vm1329 = vcmp.gt.f32.partialorder %v1303, 0.0
        %vm1330 = vcmp.gt.f32.partialorder %v1306, 0.0
        %vm1331 = vcmp.gt.f32.partialorder %v1311, 0.0
        %vm1332 = vcmp.gt.f32.partialorder %v1314, 0.0
        %v1333 = vmul.f32 %v1255, 0.01
        %v1334 = vmul.f32 %v1258, 0.01
        %v1335 = vmul.f32 %v1263, 0.01
        %v1336 = vmul.f32 %v1266, 0.01
        %v1337 = vmul.f32 %v1271, 0.01
        %v1338 = vmul.f32 %v1274, 0.01
        %v1339 = vmul.f32 %v1279, 0.01
        %v1340 = vmul.f32 %v1282, 0.01
        %v1341 = vmul.f32 %v1287, 0.01
        %v1342 = vmul.f32 %v1290, 0.01
        %v1343 = vmul.f32 %v1295, 0.01
        %v1344 = vmul.f32 %v1298, 0.01
        %v1345 = vmul.f32 %v1303, 0.01
        %v1346 = vmul.f32 %v1306, 0.01
        %v1347 = vmul.f32 %v1311, 0.01
        %v1348 = vmul.f32 %v1314, 0.01
        %v1349 = vsel %vm1317, %v1255, %v1333
        %v1350 = vsel %vm1318, %v1258, %v1334
        %v1351 = vsel %vm1319, %v1263, %v1335
        %v1352 = vsel %vm1320, %v1266, %v1336
        %v1353 = vsel %vm1321, %v1271, %v1337
        %v1354 = vsel %vm1322, %v1274, %v1338
        %v1355 = vsel %vm1323, %v1279, %v1339
        %v1356 = vsel %vm1324, %v1282, %v1340
        %v1357 = vsel %vm1325, %v1287, %v1341
        %v1358 = vsel %vm1326, %v1290, %v1342
        %v1359 = vsel %vm1327, %v1295, %v1343
        %v1360 = vsel %vm1328, %v1298, %v1344
        %v1361 = vsel %vm1329, %v1303, %v1345
        %v1362 = vsel %vm1330, %v1306, %v1346
        %v1363 = vsel %vm1331, %v1311, %v1347
        %v1364 = vsel %vm1332, %v1314, %v1348
        %v1365 = vpack.c.bf16 %v1350, %v1349
        %v1366 = vpack.c.bf16 %v1352, %v1351
        %v1367 = vpack.c.bf16 %v1354, %v1353
        %v1368 = vpack.c.bf16 %v1356, %v1355
        %v1369 = vpack.c.bf16 %v1358, %v1357
        %v1370 = vpack.c.bf16 %v1360, %v1359
        %v1371 = vpack.c.bf16 %v1362, %v1361
        %v1372 = vpack.c.bf16 %v1364, %v1363
        %v1373 = vld [vmem:[%s9] sm:$0xf]
        %v1374 = vld [vmem:[%s9 + $0x4] sm:$0xf]
        %v1375 = vld [vmem:[%s9 + $0x8] sm:$0xf]
        %v1376 = vld [vmem:[%s9 + $0xc] sm:$0xf]
        %v1377 = vld [vmem:[%s9 + $0x10] sm:$0xf]
        %v1378 = vld [vmem:[%s9 + $0x14] sm:$0xf]
        %v1379 = vld [vmem:[%s9 + $0x18] sm:$0xf]
        %v1380 = vld [vmem:[%s9 + $0x1c] sm:$0xf]
        %v1381 = vld [vmem:[%s9 + $0x20] sm:$0xf]
        %v1382 = vld [vmem:[%s9 + $0x24] sm:$0xf]
        %v1383 = vld [vmem:[%s9 + $0x28] sm:$0xf]
        %v1384 = vld [vmem:[%s9 + $0x2c] sm:$0xf]
        %v1385 = vld [vmem:[%s9 + $0x30] sm:$0xf]
        %v1386 = vld [vmem:[%s9 + $0x34] sm:$0xf]
        %v1387 = vld [vmem:[%s9 + $0x38] sm:$0xf]
        %v1388 = vld [vmem:[%s9 + $0x3c] sm:$0xf]
        %v1389 = vld [vmem:[%s10] sm:$0x1]
        %v1391 = vlaneseq
        %v1392 = vshrl.u32 %v1391, 7
        %v1393 = vsub.s32 0, %v1392
        %v1394 = vrot.slane %v1389, %v1393
        %v1412 = vunpack.c.l.b16 %v1373
        %v1413 = vunpack.c.l.b16 %v1374
        %v1414 = vunpack.c.l.b16 %v1375
        %v1415 = vunpack.c.l.b16 %v1376
        %v1416 = vunpack.c.l.b16 %v1377
        %v1417 = vunpack.c.l.b16 %v1378
        %v1418 = vunpack.c.l.b16 %v1379
        %v1419 = vunpack.c.l.b16 %v1380
        %v1420 = vunpack.c.l.b16 %v1381
        %v1421 = vunpack.c.l.b16 %v1382
        %v1422 = vunpack.c.l.b16 %v1383
        %v1423 = vunpack.c.l.b16 %v1384
        %v1424 = vunpack.c.l.b16 %v1385
        %v1425 = vunpack.c.l.b16 %v1386
        %v1426 = vunpack.c.l.b16 %v1387
        %v1427 = vunpack.c.l.b16 %v1388
        %v1428 = vpack.c.b16 %v1413, %v1412
        %v1429 = vpack.c.b16 %v1415, %v1414
        %v1430 = vpack.c.b16 %v1417, %v1416
        %v1431 = vpack.c.b16 %v1419, %v1418
        %v1432 = vpack.c.b16 %v1421, %v1420
        %v1433 = vpack.c.b16 %v1423, %v1422
        %v1434 = vpack.c.b16 %v1425, %v1424
        %v1435 = vpack.c.b16 %v1427, %v1426
        %1444 = vmatprep.subr.bf16.mxu0 0
        %1445 = vmatpush1.bf16.msra.mxu0 %v1428
        %1446 = vmatprep.subr.bf16.mxu0 0
        %1447 = vmatpush1.bf16.msra.mxu0 %v1429
        %1448 = vmatprep.subr.bf16.mxu0 0
        %1449 = vmatpush1.bf16.msra.mxu0 %v1430
        %1450 = vmatprep.subr.bf16.mxu0 0
        %1451 = vmatpush1.bf16.msra.mxu0 %v1431
        %1452 = vmatprep.subr.bf16.mxu0 0
        %1453 = vmatpush1.bf16.msra.mxu0 %v1432
        %1454 = vmatprep.subr.bf16.mxu0 0
        %1455 = vmatpush1.bf16.msra.mxu0 %v1433
        %1456 = vmatprep.subr.bf16.mxu0 0
        %1457 = vmatpush1.bf16.msra.mxu0 %v1434
        %1458 = vmatprep.subr.bf16.mxu0 0
        %1459 = vmatpush1.bf16.msra.mxu0 %v1435
        %1460 = vmatprep.subr.bf16.mxu0 0
        %1461 = vmatpush1.bf16.msra.mxu0 0
        %1462 = vmatprep.subr.bf16.mxu0 0
        %1463 = vmatpush1.bf16.msra.mxu0 0
        %1464 = vmatprep.subr.bf16.mxu0 0
        %1465 = vmatpush1.bf16.msra.mxu0 0
        %1466 = vmatprep.subr.bf16.mxu0 0
        %1467 = vmatpush1.bf16.msra.mxu0 0
        %1468 = vmatprep.subr.bf16.mxu0 0
        %1469 = vmatpush1.bf16.msra.mxu0 0
        %1470 = vmatprep.subr.bf16.mxu0 0
        %1471 = vmatpush1.bf16.msra.mxu0 0
        %1472 = vmatprep.subr.bf16.mxu0 0
        %1473 = vmatpush1.bf16.msra.mxu0 0
        %1474 = vmatprep.subr.bf16.mxu0 0
        %1475 = vmatpush1.bf16.msra.mxu0 0
        %1476 = vmatprep.mubr.bf16.mxu0 0
        %1477 = vmatmul.mubr.bf16.gmra.mrb[0].mxu0 %v1365
        %v1478 = vpop.f32.mrb[0].mxu0
        %v1479 = vadd.f32 %v1394, %v1478
        %v1480 = vpop.f32.mrb[0].mxu0
        %v1481 = vpop.f32.mrb[0].mxu0
        %v1482 = vadd.f32 %v1394, %v1481
        %v1483 = vpop.f32.mrb[0].mxu0
        %1484 = vmatprep.mubr.bf16.mxu0 0
        %1485 = vmatmul.mubr.bf16.gmra.mrb[0].mxu0 %v1366
        %v1486 = vpop.f32.mrb[0].mxu0
        %v1487 = vadd.f32 %v1394, %v1486
        %v1488 = vpop.f32.mrb[0].mxu0
        %v1489 = vpop.f32.mrb[0].mxu0
        %v1490 = vadd.f32 %v1394, %v1489
        %v1491 = vpop.f32.mrb[0].mxu0
        %1492 = vmatprep.mubr.bf16.mxu0 0
        %1493 = vmatmul.mubr.bf16.gmra.mrb[0].mxu0 %v1367
        %v1494 = vpop.f32.mrb[0].mxu0
        %v1495 = vadd.f32 %v1394, %v1494
        %v1496 = vpop.f32.mrb[0].mxu0
        %v1497 = vpop.f32.mrb[0].mxu0
        %v1498 = vadd.f32 %v1394, %v1497
        %v1499 = vpop.f32.mrb[0].mxu0
        %1500 = vmatprep.mubr.bf16.mxu0 0
        %1501 = vmatmul.mubr.bf16.gmra.mrb[0].mxu0 %v1368
        %v1502 = vpop.f32.mrb[0].mxu0
        %v1503 = vadd.f32 %v1394, %v1502
        %v1504 = vpop.f32.mrb[0].mxu0
        %v1505 = vpop.f32.mrb[0].mxu0
        %v1506 = vadd.f32 %v1394, %v1505
        %v1507 = vpop.f32.mrb[0].mxu0
        %1508 = vmatprep.mubr.bf16.mxu0 0
        %1509 = vmatmul.mubr.bf16.gmra.mrb[0].mxu0 %v1369
        %v1510 = vpop.f32.mrb[0].mxu0
        %v1511 = vadd.f32 %v1394, %v1510
        %v1512 = vpop.f32.mrb[0].mxu0
        %v1513 = vpop.f32.mrb[0].mxu0
        %v1514 = vadd.f32 %v1394, %v1513
        %v1515 = vpop.f32.mrb[0].mxu0
        %1516 = vmatprep.mubr.bf16.mxu0 0
        %1517 = vmatmul.mubr.bf16.gmra.mrb[0].mxu0 %v1370
        %v1518 = vpop.f32.mrb[0].mxu0
        %v1519 = vadd.f32 %v1394, %v1518
        %v1520 = vpop.f32.mrb[0].mxu0
        %v1521 = vpop.f32.mrb[0].mxu0
        %v1522 = vadd.f32 %v1394, %v1521
        %v1523 = vpop.f32.mrb[0].mxu0
        %1524 = vmatprep.mubr.bf16.mxu0 0
        %1525 = vmatmul.mubr.bf16.gmra.mrb[0].mxu0 %v1371
        %v1526 = vpop.f32.mrb[0].mxu0
        %v1527 = vadd.f32 %v1394, %v1526
        %v1528 = vpop.f32.mrb[0].mxu0
        %v1529 = vpop.f32.mrb[0].mxu0
        %v1530 = vadd.f32 %v1394, %v1529
        %v1531 = vpop.f32.mrb[0].mxu0
        %1532 = vmatprep.mubr.bf16.mxu0 0
        %1533 = vmatmul.mubr.bf16.gmra.mrb[0].mxu0 %v1372
        %v1534 = vpop.f32.mrb[0].mxu0
        %v1535 = vadd.f32 %v1394, %v1534
        %v1536 = vpop.f32.mrb[0].mxu0
        %v1537 = vpop.f32.mrb[0].mxu0
        %v1538 = vadd.f32 %v1394, %v1537
        %v1539 = vpop.f32.mrb[0].mxu0
        %1540 = vdwg.mxu0
        %1541 = vmax.xlane.f32.xlu0 %v1479
        %v1542 = vpop.xlane.xlu0 %1541
        %1543 = vmax.xlane.f32.xlu0 %v1482
        %v1544 = vpop.xlane.xlu0 %1543
        %1545 = vmax.xlane.f32.xlu0 %v1487
        %v1546 = vpop.xlane.xlu0 %1545
        %1547 = vmax.xlane.f32.xlu0 %v1490
        %v1548 = vpop.xlane.xlu0 %1547
        %1549 = vmax.xlane.f32.xlu0 %v1495
        %v1550 = vpop.xlane.xlu0 %1549
        %1551 = vmax.xlane.f32.xlu0 %v1498
        %v1552 = vpop.xlane.xlu0 %1551
        %1553 = vmax.xlane.f32.xlu0 %v1503
        %v1554 = vpop.xlane.xlu0 %1553
        %1555 = vmax.xlane.f32.xlu0 %v1506
        %v1556 = vpop.xlane.xlu0 %1555
        %1557 = vmax.xlane.f32.xlu0 %v1511
        %v1558 = vpop.xlane.xlu0 %1557
        %1559 = vmax.xlane.f32.xlu0 %v1514
        %v1560 = vpop.xlane.xlu0 %1559
        %1561 = vmax.xlane.f32.xlu0 %v1519
        %v1562 = vpop.xlane.xlu0 %1561
        %1563 = vmax.xlane.f32.xlu0 %v1522
        %v1564 = vpop.xlane.xlu0 %1563
        %1565 = vmax.xlane.f32.xlu0 %v1527
        %v1566 = vpop.xlane.xlu0 %1565
        %1567 = vmax.xlane.f32.xlu0 %v1530
        %v1568 = vpop.xlane.xlu0 %1567
        %1569 = vmax.xlane.f32.xlu0 %v1535
        %v1570 = vpop.xlane.xlu0 %1569
        %1571 = vmax.xlane.f32.xlu0 %v1538
        %v1572 = vpop.xlane.xlu0 %1571
        %v1573 = vsub.f32 %v1479, %v1542
        %v1574 = vsub.f32 %v1482, %v1544
        %v1575 = vsub.f32 %v1487, %v1546
        %v1576 = vsub.f32 %v1490, %v1548
        %v1577 = vsub.f32 %v1495, %v1550
        %v1578 = vsub.f32 %v1498, %v1552
        %v1579 = vsub.f32 %v1503, %v1554
        %v1580 = vsub.f32 %v1506, %v1556
        %v1581 = vsub.f32 %v1511, %v1558
        %v1582 = vsub.f32 %v1514, %v1560
        %v1583 = vsub.f32 %v1519, %v1562
        %v1584 = vsub.f32 %v1522, %v1564
        %v1585 = vsub.f32 %v1527, %v1566
        %v1586 = vsub.f32 %v1530, %v1568
        %v1587 = vsub.f32 %v1535, %v1570
        %v1588 = vsub.f32 %v1538, %v1572
        %v1589 = vmul.f32 %v1573, 1.442695
        %v1590 = vpow.pop %v1589
        %v1591 = vmul.f32 %v1574, 1.442695
        %v1592 = vpow.pop %v1591
        %v1593 = vmul.f32 %v1575, 1.442695
        %v1594 = vpow.pop %v1593
        %v1595 = vmul.f32 %v1576, 1.442695
        %v1596 = vpow.pop %v1595
        %v1597 = vmul.f32 %v1577, 1.442695
        %v1598 = vpow.pop %v1597
        %v1599 = vmul.f32 %v1578, 1.442695
        %v1600 = vpow.pop %v1599
        %v1601 = vmul.f32 %v1579, 1.442695
        %v1602 = vpow.pop %v1601
        %v1603 = vmul.f32 %v1580, 1.442695
        %v1604 = vpow.pop %v1603
        %v1605 = vmul.f32 %v1581, 1.442695
        %v1606 = vpow.pop %v1605
        %v1607 = vmul.f32 %v1582, 1.442695
        %v1608 = vpow.pop %v1607
        %v1609 = vmul.f32 %v1583, 1.442695
        %v1610 = vpow.pop %v1609
        %v1611 = vmul.f32 %v1584, 1.442695
        %v1612 = vpow.pop %v1611
        %v1613 = vmul.f32 %v1585, 1.442695
        %v1614 = vpow.pop %v1613
        %v1615 = vmul.f32 %v1586, 1.442695
        %v1616 = vpow.pop %v1615
        %v1617 = vmul.f32 %v1587, 1.442695
        %v1618 = vpow.pop %v1617
        %v1619 = vmul.f32 %v1588, 1.442695
        %v1620 = vpow.pop %v1619
        %1621 = vadd.xlane.f32.xlu0 %v1590
        %v1622 = vpop.xlane.xlu0 %1621
        %1623 = vadd.xlane.f32.xlu0 %v1592
        %v1624 = vpop.xlane.xlu0 %1623
        %1625 = vadd.xlane.f32.xlu0 %v1594
        %v1626 = vpop.xlane.xlu0 %1625
        %1627 = vadd.xlane.f32.xlu0 %v1596
        %v1628 = vpop.xlane.xlu0 %1627
        %1629 = vadd.xlane.f32.xlu0 %v1598
        %v1630 = vpop.xlane.xlu0 %1629
        %1631 = vadd.xlane.f32.xlu0 %v1600
        %v1632 = vpop.xlane.xlu0 %1631
        %1633 = vadd.xlane.f32.xlu0 %v1602
        %v1634 = vpop.xlane.xlu0 %1633
        %1635 = vadd.xlane.f32.xlu0 %v1604
        %v1636 = vpop.xlane.xlu0 %1635
        %1637 = vadd.xlane.f32.xlu0 %v1606
        %v1638 = vpop.xlane.xlu0 %1637
        %1639 = vadd.xlane.f32.xlu0 %v1608
        %v1640 = vpop.xlane.xlu0 %1639
        %1641 = vadd.xlane.f32.xlu0 %v1610
        %v1642 = vpop.xlane.xlu0 %1641
        %1643 = vadd.xlane.f32.xlu0 %v1612
        %v1644 = vpop.xlane.xlu0 %1643
        %1645 = vadd.xlane.f32.xlu0 %v1614
        %v1646 = vpop.xlane.xlu0 %1645
        %1647 = vadd.xlane.f32.xlu0 %v1616
        %v1648 = vpop.xlane.xlu0 %1647
        %1649 = vadd.xlane.f32.xlu0 %v1618
        %v1650 = vpop.xlane.xlu0 %1649
        %1651 = vadd.xlane.f32.xlu0 %v1620
        %v1652 = vpop.xlane.xlu0 %1651
        %v1653 = vrcp.pop %v1622
        %v1654 = vrcp.pop %v1624
        %v1655 = vrcp.pop %v1626
        %v1656 = vrcp.pop %v1628
        %v1657 = vrcp.pop %v1630
        %v1658 = vrcp.pop %v1632
        %v1659 = vrcp.pop %v1634
        %v1660 = vrcp.pop %v1636
        %v1661 = vrcp.pop %v1638
        %v1662 = vrcp.pop %v1640
        %v1663 = vrcp.pop %v1642
        %v1664 = vrcp.pop %v1644
        %v1665 = vrcp.pop %v1646
        %v1666 = vrcp.pop %v1648
        %v1667 = vrcp.pop %v1650
        %v1668 = vrcp.pop %v1652
        %v1669 = vmul.f32 %v1590, %v1653
        %v1670 = vmul.f32 %v1592, %v1654
        %v1671 = vmul.f32 %v1594, %v1655
        %v1672 = vmul.f32 %v1596, %v1656
        %v1673 = vmul.f32 %v1598, %v1657
        %v1674 = vmul.f32 %v1600, %v1658
        %v1675 = vmul.f32 %v1602, %v1659
        %v1676 = vmul.f32 %v1604, %v1660
        %v1677 = vmul.f32 %v1606, %v1661
        %v1678 = vmul.f32 %v1608, %v1662
        %v1679 = vmul.f32 %v1610, %v1663
        %v1680 = vmul.f32 %v1612, %v1664
        %v1681 = vmul.f32 %v1614, %v1665
        %v1682 = vmul.f32 %v1616, %v1666
        %v1683 = vmul.f32 %v1618, %v1667
        %v1684 = vmul.f32 %v1620, %v1668
        %1685 = vst [vmem:[%s435] sm:$0xff] %v1669
        %1686 = vst [vmem:[%s435 + $0x8] sm:$0xff] %v1670
        %1687 = vst [vmem:[%s435 + $0x10] sm:$0xff] %v1671
        %1688 = vst [vmem:[%s435 + $0x18] sm:$0xff] %v1672
        %1689 = vst [vmem:[%s435 + $0x20] sm:$0xff] %v1673
        %1690 = vst [vmem:[%s435 + $0x28] sm:$0xff] %v1674
        %1691 = vst [vmem:[%s435 + $0x30] sm:$0xff] %v1675
        %1692 = vst [vmem:[%s435 + $0x38] sm:$0xff] %v1676
        %1693 = vst [vmem:[%s435 + $0x40] sm:$0xff] %v1677
        %1694 = vst [vmem:[%s435 + $0x48] sm:$0xff] %v1678
        %1695 = vst [vmem:[%s435 + $0x50] sm:$0xff] %v1679
        %1696 = vst [vmem:[%s435 + $0x58] sm:$0xff] %v1680
        %1697 = vst [vmem:[%s435 + $0x60] sm:$0xff] %v1681
        %1698 = vst [vmem:[%s435 + $0x68] sm:$0xff] %v1682
        %1699 = vst [vmem:[%s435 + $0x70] sm:$0xff] %v1683
        %1700 = vst [vmem:[%s435 + $0x78] sm:$0xff] %v1684
        %s1701 = sand.u32 %s272, 1
        %s1702 = scalar_lea.sflag [#allocation4], %s1701
        %s1703 = sand.u32 %s272, 1
        %s1704 = smul.addr %s1703, 128
        %s1705 = scalar_lea.vmem [#allocation10], %s1704
        // Predicated region
        $region81: #{tpu_custom_call.1} parent=63 // pred_check
          %p1706 = pneg %p282
        $region82: #{tpu_custom_call.1} parent=63 // pred_check_branch
          %1708 = sbr.rel (%p1706) target = $region84
        $region83: #{tpu_custom_call.1} parent=63 // pred_region
          %s1709 = smul.u32 16, %s28
          %s1711 = ssub.s32 2048, 2048
          %1712 = vsyncadd %s1702, %s1711
          %s1713 = smul.addr %s1709, 128
          %s1714 = scalar_lea.hbm %s11, %s1713
          %s1715 = sshll.u32 %s1705, 4
          %s1716 = int_to_ptr.vmem [resolvable:$true] %s1715
          %1721 = dma.vmem_to_hbm [thread:$0]  %s1716, 2048, %s1714, %s1702, 128, 128, 8
        $region84: #{tpu_custom_call.1} parent=63 // pred_fallthru
          _
      $region64: #{tpu_custom_call.1} parent=5 // pred_fallthru
        _
      %p1722 = scmp.le.s32.totalorder 2, %s23
      // Predicated region
      $region85: #{tpu_custom_call.1} parent=5 // pred_check
        %p1723 = pneg %p1722
      $region86: #{tpu_custom_call.1} parent=5 // pred_check_branch
        %1725 = sbr.rel (%p1723) target = $region88
      $region87: #{tpu_custom_call.1} parent=5 // pred_region
        %s1726 = ssub.s32 %s23, 2
        // Predicated region
        $region89: #{tpu_custom_call.1} parent=87 // pred_check
          %p1727 = pneg %p288
        $region90: #{tpu_custom_call.1} parent=87 // pred_check_branch
          %1729 = sbr.rel (%p1727) target = $region92
        $region91: #{tpu_custom_call.1} parent=87 // pred_region
          %s1730 = sand.u32 %s273, 1
          %s1731 = scalar_lea.sflag [#allocation4], %s1730
          %s1732 = sand.u32 %s273, 1
          %s1733 = smul.addr %s1732, 128
          %s1734 = scalar_lea.vmem [#allocation10], %s1733
          %1735 = dma.done %s1731, 2048
        $region92: #{tpu_custom_call.1} parent=87 // pred_fallthru
          _
      $region88: #{tpu_custom_call.1} parent=5 // pred_fallthru
        _
    $region6: #{tpu_custom_call.1} parent=1 // loop_footer
      %s27 = sadd.s32 1, %s23
    $region7: #{tpu_custom_call.1} parent=1 // loop_footer_branch
      %22 = sbr.rel target = $region3
    $region8: #{tpu_custom_call.1} parent=1 // loop_exit
      _
    %1736 = vsyncpa [#allocation3], 1
    %s1737 = scalar_lea.sflag [#allocation3], 1
    %1738 = vsyncpa %s1737, 1
    %1739 = vsyncpa [#allocation6], 1
    %1740 = vsyncpa [#allocation9], 1
    %1741 = vsyncpa [#allocation4], 1
    %s1742 = scalar_lea.sflag [#allocation4], 1
    %1743 = vsyncpa %s1742, 1

</llo_original>
